<compile_context>
chip_gen: v7x
topology: tpu7x:2x2x1
jax: 0.10.0
libtpu: 0.0.40
codegen_flags: <defaults>
</compile_context>

<pallas_src>
import functools

import jax
import jax.numpy as jnp
import numpy as np
from jax.experimental import pallas as pl
from jax.experimental.pallas import tpu as pltpu


# ---------------------------------------------------------------------------
# Kernel: fused bidirectional LSTM recurrence + Linear, one invocation.
# ---------------------------------------------------------------------------
def bilstm_fc_kernel(xc_ref,     # (T*B, 2*nIn)  [x(t) | x(T-1-t)] per time row-block
                     wih_ref,    # (2*nIn, 8H)   block-structured, gate-major columns
                     wrec_ref,   # (2H, 8H)      block-diagonal recurrent weights
                     b_ref,      # (1, 8H)       combined b_ih+b_hh, gate-major
                     wfc_ref,    # (2H, nOut)    FC weight (rows: [fwd | bwd])
                     bfc_ref,    # (1, nOut)
                     out_ref,    # (T*B, nOut)   flat, lane-dense output
                     xg_ref,     # scratch (T*B, 8H) gate pre-activations
                     r_ref,      # scratch (T*B, 2H) per-time [h_f(t) | h_b(t)]
                     *, seq_len, batch):
    T, B = seq_len, batch
    H2 = wrec_ref.shape[0]        # 2H (both directions fused)
    H = H2 // 2

    # Hoisted input projection for BOTH directions (+ combined bias):
    # one big MXU matmul over M = T*B rows.
    xg_ref[...] = (jnp.dot(xc_ref[...], wih_ref[...],
                           preferred_element_type=jnp.float32) + b_ref[...])

    w_rec = wrec_ref[...]

    h = jnp.zeros((B, H2), jnp.float32)   # [h_f | h_b]
    c = jnp.zeros((B, H2), jnp.float32)   # [c_f | c_b]

    # Serial recurrence, statically unrolled (T is a small compile-time const).
    # One matmul + one set of gate nonlinearities per step for BOTH directions.
    for s in range(T):
        pre = xg_ref[s * B:(s + 1) * B, :]                         # (B, 8H)
        gates = pre + jnp.dot(h, w_rec, preferred_element_type=jnp.float32)
        i = jax.nn.sigmoid(gates[:, 0 * H2:1 * H2])                # (B, 2H) each
        f = jax.nn.sigmoid(gates[:, 1 * H2:2 * H2])
        g = jnp.tanh(gates[:, 2 * H2:3 * H2])
        o = jax.nn.sigmoid(gates[:, 3 * H2:4 * H2])
        c = f * c + i * g
        h = o * jnp.tanh(c)
        # Forward half corresponds to time s, backward half to time T-1-s.
        r_ref[s * B:(s + 1) * B, 0:H] = h[:, 0:H]
        tb = T - 1 - s
        r_ref[tb * B:(tb + 1) * B, H:H2] = h[:, H:H2]

    # Fused Linear: out = [h_f(t) | h_b(t)] @ W_fc + b_fc, one batched matmul.
    out_ref[...] = (jnp.dot(r_ref[...], wfc_ref[...],
                            preferred_element_type=jnp.float32) + bfc_ref[...])


# ---------------------------------------------------------------------------
# Wrapper: one-time weight/layout prep (XLA side) + grid-less pallas_call.
# ---------------------------------------------------------------------------
def _interleave_gates(wf, wb, H):
    """(r,4H),(r,4H) -> (r,8H) with columns [i_f,i_b, f_f,f_b, g_f,g_b, o_f,o_b]."""
    r = wf.shape[0]
    wf4 = wf.reshape(r, 4, H)
    wb4 = wb.reshape(r, 4, H)
    return jnp.stack([wf4, wb4], axis=2).reshape(r, 8 * H)


@jax.jit
def bidirectional_lstm(x, params):
    T, B, nIn = x.shape
    H = params["whh_f"].shape[0]          # whh_f: (H, 4H)
    nOut = params["w_fc"].shape[1]        # w_fc:  (2H, nOut)

    # Combined input: row block s holds [x[s] | x[T-1-s]]  -> (T*B, 2*nIn)
    x_comb = jnp.concatenate([x, jnp.flip(x, axis=0)], axis=-1).reshape(T * B, 2 * nIn)

    # Block-structured input weight (2*nIn, 8H): forward rows feed forward gate
    # columns, backward rows feed backward gate columns (gate-major layout).
    zi = jnp.zeros_like(params["wih_f"])                    # (nIn, 4H)
    wih_comb = jnp.concatenate([_interleave_gates(params["wih_f"], zi, H),
                                _interleave_gates(zi, params["wih_b"], H)], axis=0)

    # Block-diagonal recurrent weight (2H, 8H), gate-major columns.
    zh = jnp.zeros_like(params["whh_f"])                    # (H, 4H)
    w_rec = jnp.concatenate([_interleave_gates(params["whh_f"], zh, H),
                             _interleave_gates(zh, params["whh_b"], H)], axis=0)

    # Combined bias (1, 8H), gate-major.
    b_comb = _interleave_gates(params["b_f"], params["b_b"], H)

    out2 = pl.pallas_call(
        functools.partial(bilstm_fc_kernel, seq_len=T, batch=B),
        out_shape=jax.ShapeDtypeStruct((T * B, nOut), jnp.float32),
        scratch_shapes=[
            pltpu.VMEM((T * B, 8 * H), jnp.float32),   # gate pre-activations
            pltpu.VMEM((T * B, 2 * H), jnp.float32),   # per-time [h_f | h_b]
        ],
    )(x_comb, wih_comb, w_rec, b_comb, params["w_fc"], params["b_fc"])

    return out2.reshape(T, B, nOut)


# ---------------------------------------------------------------------------
# Pure-JAX reference (PyTorch nn.LSTM bidirectional + Linear semantics)
# ---------------------------------------------------------------------------
def lstm_dir_ref(x, wih, whh, b, reverse):
    T, B, _ = x.shape
    H = whh.shape[0]
    h = jnp.zeros((B, H), jnp.float32)
    c = jnp.zeros((B, H), jnp.float32)
    out = jnp.zeros((T, B, H), jnp.float32)
    ts = range(T - 1, -1, -1) if reverse else range(T)
    for t in ts:
        gates = x[t] @ wih + h @ whh + b
        i = jax.nn.sigmoid(gates[:, 0 * H:1 * H])
        f = jax.nn.sigmoid(gates[:, 1 * H:2 * H])
        g = jnp.tanh(gates[:, 2 * H:3 * H])
        o = jax.nn.sigmoid(gates[:, 3 * H:4 * H])
        c = f * c + i * g
        h = o * jnp.tanh(c)
        out = out.at[t].set(h)
    return out


def reference(x, params):
    T, B, _ = x.shape
    of = lstm_dir_ref(x, params["wih_f"], params["whh_f"], params["b_f"], False)
    ob = lstm_dir_ref(x, params["wih_b"], params["whh_b"], params["b_b"], True)
    r = jnp.concatenate([of, ob], axis=-1).reshape(T * B, -1)
    out = r @ params["w_fc"] + params["b_fc"]
    return out.reshape(T, B, -1)


# ---------------------------------------------------------------------------
# Main
# ---------------------------------------------------------------------------
if __name__ == "__main__":
    T, B, nIn, nHidden, nOut = 8, 2, 16, 32, 8

    key = jax.random.PRNGKey(0)
    ks = jax.random.split(key, 12)
    s = 1.0 / np.sqrt(nHidden)
    u = lambda k, shape: jax.random.uniform(k, shape, jnp.float32, -s, s)

    # PyTorch stores weight_ih as (4H, nIn); here pre-transposed to (nIn, 4H).
    # Gate order i, f, g, o.  b_* = b_ih + b_hh combined.
    params = {
        "wih_f": u(ks[0], (nIn, 4 * nHidden)),
        "whh_f": u(ks[1], (nHidden, 4 * nHidden)),
        "b_f":   u(ks[2], (1, 4 * nHidden)) + u(ks[3], (1, 4 * nHidden)),
        "wih_b": u(ks[4], (nIn, 4 * nHidden)),
        "whh_b": u(ks[5], (nHidden, 4 * nHidden)),
        "b_b":   u(ks[6], (1, 4 * nHidden)) + u(ks[7], (1, 4 * nHidden)),
        "w_fc":  jax.random.uniform(ks[8], (2 * nHidden, nOut), jnp.float32,
                                    -1.0 / np.sqrt(2 * nHidden),
                                    1.0 / np.sqrt(2 * nHidden)),
        "b_fc":  jax.random.uniform(ks[9], (1, nOut), jnp.float32,
                                    -1.0 / np.sqrt(2 * nHidden),
                                    1.0 / np.sqrt(2 * nHidden)),
    }

    x = jax.random.normal(ks[10], (T, B, nIn), jnp.float32)

    out = bidirectional_lstm(x, params)
    out = jax.block_until_ready(out)
    assert out.shape == (T, B, nOut), out.shape

    ref = jax.block_until_ready(reference(x, params))
    np.testing.assert_allclose(np.asarray(out), np.asarray(ref),
                               rtol=5e-3, atol=5e-3)

    print("KERNEL_OK")
</pallas_src>

<mosaic_0001>
module attributes {stable_mosaic.version = 11 : i64} {
  func.func @bilstm_fc_kernel(%arg0: memref<16x32xf32, #tpu.memory_space<vmem>>, %arg1: memref<32x256xf32, #tpu.memory_space<vmem>>, %arg2: memref<64x256xf32, #tpu.memory_space<vmem>>, %arg3: memref<1x256xf32, #tpu.memory_space<vmem>>, %arg4: memref<64x8xf32, #tpu.memory_space<vmem>>, %arg5: memref<1x8xf32, #tpu.memory_space<vmem>>, %arg6: memref<16x8xf32, #tpu.memory_space<vmem>>, %arg7: memref<16x256xf32, #tpu.memory_space<vmem>>, %arg8: memref<16x64xf32, #tpu.memory_space<vmem>>) attributes {dimension_semantics = [], scalar_prefetch = 0 : i64, scratch_operands = 2 : i64, tpu.core_type = #tpu.core_type<tc>} {
    %c0 = arith.constant 0 : index
    %c0_0 = arith.constant 0 : index
    %0 = vector.load %arg0[%c0, %c0_0] : memref<16x32xf32, #tpu.memory_space<vmem>>, vector<16x32xf32>
    %c0_1 = arith.constant 0 : index
    %c0_2 = arith.constant 0 : index
    %1 = vector.load %arg1[%c0_1, %c0_2] : memref<32x256xf32, #tpu.memory_space<vmem>>, vector<32x256xf32>
    %cst = arith.constant dense<0.000000e+00> : vector<16x256xf32>
    %2 = tpu.matmul %0, %1, %cst {dimension_numbers = #tpu.dot_dimension_numbers<[1], [0], [0], [1], [0, 0, 1, 1], [], []>} : vector<16x32xf32>, vector<32x256xf32>, vector<16x256xf32> -> vector<16x256xf32>
    %c0_3 = arith.constant 0 : index
    %c0_4 = arith.constant 0 : index
    %3 = vector.load %arg3[%c0_3, %c0_4] : memref<1x256xf32, #tpu.memory_space<vmem>>, vector<1x256xf32>
    %4 = vector.broadcast %3 : vector<1x256xf32> to vector<16x256xf32>
    %5 = arith.addf %2, %4 : vector<16x256xf32>
    %c0_5 = arith.constant 0 : index
    %c0_6 = arith.constant 0 : index
    %6 = vector.load %arg7[%c0_5, %c0_6] : memref<16x256xf32, #tpu.memory_space<vmem>>, vector<16x256xf32>
    tpu.vector_store %arg7[%c0_5, %c0_6], %5 {strides = array<i32>} : memref<16x256xf32, #tpu.memory_space<vmem>>, vector<16x256xf32>,
    %c0_7 = arith.constant 0 : index
    %c0_8 = arith.constant 0 : index
    %7 = vector.load %arg2[%c0_7, %c0_8] : memref<64x256xf32, #tpu.memory_space<vmem>>, vector<64x256xf32>
    %cst_9 = arith.constant 0.000000e+00 : f32
    %8 = vector.broadcast %cst_9 : f32 to vector<2x64xf32>
    %cst_10 = arith.constant 0.000000e+00 : f32
    %9 = vector.broadcast %cst_10 : f32 to vector<2x64xf32>
    %c0_11 = arith.constant 0 : index
    %c0_12 = arith.constant 0 : index
    %10 = vector.load %arg7[%c0_11, %c0_12] : memref<16x256xf32, #tpu.memory_space<vmem>>, vector<2x256xf32>
    %cst_13 = arith.constant dense<0.000000e+00> : vector<2x256xf32>
    %11 = tpu.matmul %8, %7, %cst_13 {dimension_numbers = #tpu.dot_dimension_numbers<[1], [0], [0], [1], [0, 0, 1, 1], [], []>} : vector<2x64xf32>, vector<64x256xf32>, vector<2x256xf32> -> vector<2x256xf32>
    %12 = arith.addf %10, %11 : vector<2x256xf32>
    %13 = vector.extract_strided_slice %12 {offsets = [0, 0], sizes = [2, 64], strides = [1, 1]} : vector<2x256xf32> to vector<2x64xf32>
    %14 = arith.negf %13 : vector<2x64xf32>
    %15 = math.exp %14 : vector<2x64xf32>
    %cst_14 = arith.constant 1.000000e+00 : f32
    %16 = vector.broadcast %cst_14 : f32 to vector<2x64xf32>
    %17 = arith.addf %16, %15 : vector<2x64xf32>
    %18 = arith.divf %16, %17 : vector<2x64xf32>
    %19 = vector.extract_strided_slice %12 {offsets = [0, 64], sizes = [2, 64], strides = [1, 1]} : vector<2x256xf32> to vector<2x64xf32>
    %20 = arith.negf %19 : vector<2x64xf32>
    %21 = math.exp %20 : vector<2x64xf32>
    %cst_15 = arith.constant 1.000000e+00 : f32
    %22 = vector.broadcast %cst_15 : f32 to vector<2x64xf32>
    %23 = arith.addf %22, %21 : vector<2x64xf32>
    %24 = arith.divf %22, %23 : vector<2x64xf32>
    %25 = vector.extract_strided_slice %12 {offsets = [0, 128], sizes = [2, 64], strides = [1, 1]} : vector<2x256xf32> to vector<2x64xf32>
    %26 = math.tanh %25 : vector<2x64xf32>
    %27 = vector.extract_strided_slice %12 {offsets = [0, 192], sizes = [2, 64], strides = [1, 1]} : vector<2x256xf32> to vector<2x64xf32>
    %28 = arith.negf %27 : vector<2x64xf32>
    %29 = math.exp %28 : vector<2x64xf32>
    %cst_16 = arith.constant 1.000000e+00 : f32
    %30 = vector.broadcast %cst_16 : f32 to vector<2x64xf32>
    %31 = arith.addf %30, %29 : vector<2x64xf32>
    %32 = arith.divf %30, %31 : vector<2x64xf32>
    %33 = arith.mulf %24, %9 : vector<2x64xf32>
    %34 = arith.mulf %18, %26 : vector<2x64xf32>
    %35 = arith.addf %33, %34 : vector<2x64xf32>
    %36 = math.tanh %35 : vector<2x64xf32>
    %37 = arith.mulf %32, %36 : vector<2x64xf32>
    %38 = vector.extract_strided_slice %37 {offsets = [0, 0], sizes = [2, 32], strides = [1, 1]} : vector<2x64xf32> to vector<2x32xf32>
    %c0_17 = arith.constant 0 : index
    %c0_18 = arith.constant 0 : index
    %39 = vector.load %arg8[%c0_17, %c0_18] : memref<16x64xf32, #tpu.memory_space<vmem>>, vector<2x32xf32>
    tpu.vector_store %arg8[%c0_17, %c0_18], %38 {strides = array<i32>} : memref<16x64xf32, #tpu.memory_space<vmem>>, vector<2x32xf32>,
    %40 = vector.extract_strided_slice %37 {offsets = [0, 32], sizes = [2, 32], strides = [1, 1]} : vector<2x64xf32> to vector<2x32xf32>
    %c14 = arith.constant 14 : index
    %c32 = arith.constant 32 : index
    %41 = vector.load %arg8[%c14, %c32] : memref<16x64xf32, #tpu.memory_space<vmem>>, vector<2x32xf32>
    tpu.vector_store %arg8[%c14, %c32], %40 {strides = array<i32>} : memref<16x64xf32, #tpu.memory_space<vmem>>, vector<2x32xf32>,
    %c2 = arith.constant 2 : index
    %c0_19 = arith.constant 0 : index
    %42 = vector.load %arg7[%c2, %c0_19] : memref<16x256xf32, #tpu.memory_space<vmem>>, vector<2x256xf32>
    %cst_20 = arith.constant dense<0.000000e+00> : vector<2x256xf32>
    %43 = tpu.matmul %37, %7, %cst_20 {dimension_numbers = #tpu.dot_dimension_numbers<[1], [0], [0], [1], [0, 0, 1, 1], [], []>} : vector<2x64xf32>, vector<64x256xf32>, vector<2x256xf32> -> vector<2x256xf32>
    %44 = arith.addf %42, %43 : vector<2x256xf32>
    %45 = vector.extract_strided_slice %44 {offsets = [0, 0], sizes = [2, 64], strides = [1, 1]} : vector<2x256xf32> to vector<2x64xf32>
    %46 = arith.negf %45 : vector<2x64xf32>
    %47 = math.exp %46 : vector<2x64xf32>
    %cst_21 = arith.constant 1.000000e+00 : f32
    %48 = vector.broadcast %cst_21 : f32 to vector<2x64xf32>
    %49 = arith.addf %48, %47 : vector<2x64xf32>
    %50 = arith.divf %48, %49 : vector<2x64xf32>
    %51 = vector.extract_strided_slice %44 {offsets = [0, 64], sizes = [2, 64], strides = [1, 1]} : vector<2x256xf32> to vector<2x64xf32>
    %52 = arith.negf %51 : vector<2x64xf32>
    %53 = math.exp %52 : vector<2x64xf32>
    %cst_22 = arith.constant 1.000000e+00 : f32
    %54 = vector.broadcast %cst_22 : f32 to vector<2x64xf32>
    %55 = arith.addf %54, %53 : vector<2x64xf32>
    %56 = arith.divf %54, %55 : vector<2x64xf32>
    %57 = vector.extract_strided_slice %44 {offsets = [0, 128], sizes = [2, 64], strides = [1, 1]} : vector<2x256xf32> to vector<2x64xf32>
    %58 = math.tanh %57 : vector<2x64xf32>
    %59 = vector.extract_strided_slice %44 {offsets = [0, 192], sizes = [2, 64], strides = [1, 1]} : vector<2x256xf32> to vector<2x64xf32>
    %60 = arith.negf %59 : vector<2x64xf32>
    %61 = math.exp %60 : vector<2x64xf32>
    %cst_23 = arith.constant 1.000000e+00 : f32
    %62 = vector.broadcast %cst_23 : f32 to vector<2x64xf32>
    %63 = arith.addf %62, %61 : vector<2x64xf32>
    %64 = arith.divf %62, %63 : vector<2x64xf32>
    %65 = arith.mulf %56, %35 : vector<2x64xf32>
    %66 = arith.mulf %50, %58 : vector<2x64xf32>
    %67 = arith.addf %65, %66 : vector<2x64xf32>
    %68 = math.tanh %67 : vector<2x64xf32>
    %69 = arith.mulf %64, %68 : vector<2x64xf32>
    %70 = vector.extract_strided_slice %69 {offsets = [0, 0], sizes = [2, 32], strides = [1, 1]} : vector<2x64xf32> to vector<2x32xf32>
    %c2_24 = arith.constant 2 : index
    %c0_25 = arith.constant 0 : index
    %71 = vector.load %arg8[%c2_24, %c0_25] : memref<16x64xf32, #tpu.memory_space<vmem>>, vector<2x32xf32>
    tpu.vector_store %arg8[%c2_24, %c0_25], %70 {strides = array<i32>} : memref<16x64xf32, #tpu.memory_space<vmem>>, vector<2x32xf32>,
    %72 = vector.extract_strided_slice %69 {offsets = [0, 32], sizes = [2, 32], strides = [1, 1]} : vector<2x64xf32> to vector<2x32xf32>
    %c12 = arith.constant 12 : index
    %c32_26 = arith.constant 32 : index
    %73 = vector.load %arg8[%c12, %c32_26] : memref<16x64xf32, #tpu.memory_space<vmem>>, vector<2x32xf32>
    tpu.vector_store %arg8[%c12, %c32_26], %72 {strides = array<i32>} : memref<16x64xf32, #tpu.memory_space<vmem>>, vector<2x32xf32>,
    %c4 = arith.constant 4 : index
    %c0_27 = arith.constant 0 : index
    %74 = vector.load %arg7[%c4, %c0_27] : memref<16x256xf32, #tpu.memory_space<vmem>>, vector<2x256xf32>
    %cst_28 = arith.constant dense<0.000000e+00> : vector<2x256xf32>
    %75 = tpu.matmul %69, %7, %cst_28 {dimension_numbers = #tpu.dot_dimension_numbers<[1], [0], [0], [1], [0, 0, 1, 1], [], []>} : vector<2x64xf32>, vector<64x256xf32>, vector<2x256xf32> -> vector<2x256xf32>
    %76 = arith.addf %74, %75 : vector<2x256xf32>
    %77 = vector.extract_strided_slice %76 {offsets = [0, 0], sizes = [2, 64], strides = [1, 1]} : vector<2x256xf32> to vector<2x64xf32>
    %78 = arith.negf %77 : vector<2x64xf32>
    %79 = math.exp %78 : vector<2x64xf32>
    %cst_29 = arith.constant 1.000000e+00 : f32
    %80 = vector.broadcast %cst_29 : f32 to vector<2x64xf32>
    %81 = arith.addf %80, %79 : vector<2x64xf32>
    %82 = arith.divf %80, %81 : vector<2x64xf32>
    %83 = vector.extract_strided_slice %76 {offsets = [0, 64], sizes = [2, 64], strides = [1, 1]} : vector<2x256xf32> to vector<2x64xf32>
    %84 = arith.negf %83 : vector<2x64xf32>
    %85 = math.exp %84 : vector<2x64xf32>
    %cst_30 = arith.constant 1.000000e+00 : f32
    %86 = vector.broadcast %cst_30 : f32 to vector<2x64xf32>
    %87 = arith.addf %86, %85 : vector<2x64xf32>
    %88 = arith.divf %86, %87 : vector<2x64xf32>
    %89 = vector.extract_strided_slice %76 {offsets = [0, 128], sizes = [2, 64], strides = [1, 1]} : vector<2x256xf32> to vector<2x64xf32>
    %90 = math.tanh %89 : vector<2x64xf32>
    %91 = vector.extract_strided_slice %76 {offsets = [0, 192], sizes = [2, 64], strides = [1, 1]} : vector<2x256xf32> to vector<2x64xf32>
    %92 = arith.negf %91 : vector<2x64xf32>
    %93 = math.exp %92 : vector<2x64xf32>
    %cst_31 = arith.constant 1.000000e+00 : f32
    %94 = vector.broadcast %cst_31 : f32 to vector<2x64xf32>
    %95 = arith.addf %94, %93 : vector<2x64xf32>
    %96 = arith.divf %94, %95 : vector<2x64xf32>
    %97 = arith.mulf %88, %67 : vector<2x64xf32>
    %98 = arith.mulf %82, %90 : vector<2x64xf32>
    %99 = arith.addf %97, %98 : vector<2x64xf32>
    %100 = math.tanh %99 : vector<2x64xf32>
    %101 = arith.mulf %96, %100 : vector<2x64xf32>
    %102 = vector.extract_strided_slice %101 {offsets = [0, 0], sizes = [2, 32], strides = [1, 1]} : vector<2x64xf32> to vector<2x32xf32>
    %c4_32 = arith.constant 4 : index
    %c0_33 = arith.constant 0 : index
    %103 = vector.load %arg8[%c4_32, %c0_33] : memref<16x64xf32, #tpu.memory_space<vmem>>, vector<2x32xf32>
    tpu.vector_store %arg8[%c4_32, %c0_33], %102 {strides = array<i32>} : memref<16x64xf32, #tpu.memory_space<vmem>>, vector<2x32xf32>,
    %104 = vector.extract_strided_slice %101 {offsets = [0, 32], sizes = [2, 32], strides = [1, 1]} : vector<2x64xf32> to vector<2x32xf32>
    %c10 = arith.constant 10 : index
    %c32_34 = arith.constant 32 : index
    %105 = vector.load %arg8[%c10, %c32_34] : memref<16x64xf32, #tpu.memory_space<vmem>>, vector<2x32xf32>
    tpu.vector_store %arg8[%c10, %c32_34], %104 {strides = array<i32>} : memref<16x64xf32, #tpu.memory_space<vmem>>, vector<2x32xf32>,
    %c6 = arith.constant 6 : index
    %c0_35 = arith.constant 0 : index
    %106 = vector.load %arg7[%c6, %c0_35] : memref<16x256xf32, #tpu.memory_space<vmem>>, vector<2x256xf32>
    %cst_36 = arith.constant dense<0.000000e+00> : vector<2x256xf32>
    %107 = tpu.matmul %101, %7, %cst_36 {dimension_numbers = #tpu.dot_dimension_numbers<[1], [0], [0], [1], [0, 0, 1, 1], [], []>} : vector<2x64xf32>, vector<64x256xf32>, vector<2x256xf32> -> vector<2x256xf32>
    %108 = arith.addf %106, %107 : vector<2x256xf32>
    %109 = vector.extract_strided_slice %108 {offsets = [0, 0], sizes = [2, 64], strides = [1, 1]} : vector<2x256xf32> to vector<2x64xf32>
    %110 = arith.negf %109 : vector<2x64xf32>
    %111 = math.exp %110 : vector<2x64xf32>
    %cst_37 = arith.constant 1.000000e+00 : f32
    %112 = vector.broadcast %cst_37 : f32 to vector<2x64xf32>
    %113 = arith.addf %112, %111 : vector<2x64xf32>
    %114 = arith.divf %112, %113 : vector<2x64xf32>
    %115 = vector.extract_strided_slice %108 {offsets = [0, 64], sizes = [2, 64], strides = [1, 1]} : vector<2x256xf32> to vector<2x64xf32>
    %116 = arith.negf %115 : vector<2x64xf32>
    %117 = math.exp %116 : vector<2x64xf32>
    %cst_38 = arith.constant 1.000000e+00 : f32
    %118 = vector.broadcast %cst_38 : f32 to vector<2x64xf32>
    %119 = arith.addf %118, %117 : vector<2x64xf32>
    %120 = arith.divf %118, %119 : vector<2x64xf32>
    %121 = vector.extract_strided_slice %108 {offsets = [0, 128], sizes = [2, 64], strides = [1, 1]} : vector<2x256xf32> to vector<2x64xf32>
    %122 = math.tanh %121 : vector<2x64xf32>
    %123 = vector.extract_strided_slice %108 {offsets = [0, 192], sizes = [2, 64], strides = [1, 1]} : vector<2x256xf32> to vector<2x64xf32>
    %124 = arith.negf %123 : vector<2x64xf32>
    %125 = math.exp %124 : vector<2x64xf32>
    %cst_39 = arith.constant 1.000000e+00 : f32
    %126 = vector.broadcast %cst_39 : f32 to vector<2x64xf32>
    %127 = arith.addf %126, %125 : vector<2x64xf32>
    %128 = arith.divf %126, %127 : vector<2x64xf32>
    %129 = arith.mulf %120, %99 : vector<2x64xf32>
    %130 = arith.mulf %114, %122 : vector<2x64xf32>
    %131 = arith.addf %129, %130 : vector<2x64xf32>
    %132 = math.tanh %131 : vector<2x64xf32>
    %133 = arith.mulf %128, %132 : vector<2x64xf32>
    %134 = vector.extract_strided_slice %133 {offsets = [0, 0], sizes = [2, 32], strides = [1, 1]} : vector<2x64xf32> to vector<2x32xf32>
    %c6_40 = arith.constant 6 : index
    %c0_41 = arith.constant 0 : index
    %135 = vector.load %arg8[%c6_40, %c0_41] : memref<16x64xf32, #tpu.memory_space<vmem>>, vector<2x32xf32>
    tpu.vector_store %arg8[%c6_40, %c0_41], %134 {strides = array<i32>} : memref<16x64xf32, #tpu.memory_space<vmem>>, vector<2x32xf32>,
    %136 = vector.extract_strided_slice %133 {offsets = [0, 32], sizes = [2, 32], strides = [1, 1]} : vector<2x64xf32> to vector<2x32xf32>
    %c8 = arith.constant 8 : index
    %c32_42 = arith.constant 32 : index
    %137 = vector.load %arg8[%c8, %c32_42] : memref<16x64xf32, #tpu.memory_space<vmem>>, vector<2x32xf32>
    tpu.vector_store %arg8[%c8, %c32_42], %136 {strides = array<i32>} : memref<16x64xf32, #tpu.memory_space<vmem>>, vector<2x32xf32>,
    %c8_43 = arith.constant 8 : index
    %c0_44 = arith.constant 0 : index
    %138 = vector.load %arg7[%c8_43, %c0_44] : memref<16x256xf32, #tpu.memory_space<vmem>>, vector<2x256xf32>
    %cst_45 = arith.constant dense<0.000000e+00> : vector<2x256xf32>
    %139 = tpu.matmul %133, %7, %cst_45 {dimension_numbers = #tpu.dot_dimension_numbers<[1], [0], [0], [1], [0, 0, 1, 1], [], []>} : vector<2x64xf32>, vector<64x256xf32>, vector<2x256xf32> -> vector<2x256xf32>
    %140 = arith.addf %138, %139 : vector<2x256xf32>
    %141 = vector.extract_strided_slice %140 {offsets = [0, 0], sizes = [2, 64], strides = [1, 1]} : vector<2x256xf32> to vector<2x64xf32>
    %142 = arith.negf %141 : vector<2x64xf32>
    %143 = math.exp %142 : vector<2x64xf32>
    %cst_46 = arith.constant 1.000000e+00 : f32
    %144 = vector.broadcast %cst_46 : f32 to vector<2x64xf32>
    %145 = arith.addf %144, %143 : vector<2x64xf32>
    %146 = arith.divf %144, %145 : vector<2x64xf32>
    %147 = vector.extract_strided_slice %140 {offsets = [0, 64], sizes = [2, 64], strides = [1, 1]} : vector<2x256xf32> to vector<2x64xf32>
    %148 = arith.negf %147 : vector<2x64xf32>
    %149 = math.exp %148 : vector<2x64xf32>
    %cst_47 = arith.constant 1.000000e+00 : f32
    %150 = vector.broadcast %cst_47 : f32 to vector<2x64xf32>
    %151 = arith.addf %150, %149 : vector<2x64xf32>
    %152 = arith.divf %150, %151 : vector<2x64xf32>
    %153 = vector.extract_strided_slice %140 {offsets = [0, 128], sizes = [2, 64], strides = [1, 1]} : vector<2x256xf32> to vector<2x64xf32>
    %154 = math.tanh %153 : vector<2x64xf32>
    %155 = vector.extract_strided_slice %140 {offsets = [0, 192], sizes = [2, 64], strides = [1, 1]} : vector<2x256xf32> to vector<2x64xf32>
    %156 = arith.negf %155 : vector<2x64xf32>
    %157 = math.exp %156 : vector<2x64xf32>
    %cst_48 = arith.constant 1.000000e+00 : f32
    %158 = vector.broadcast %cst_48 : f32 to vector<2x64xf32>
    %159 = arith.addf %158, %157 : vector<2x64xf32>
    %160 = arith.divf %158, %159 : vector<2x64xf32>
    %161 = arith.mulf %152, %131 : vector<2x64xf32>
    %162 = arith.mulf %146, %154 : vector<2x64xf32>
    %163 = arith.addf %161, %162 : vector<2x64xf32>
    %164 = math.tanh %163 : vector<2x64xf32>
    %165 = arith.mulf %160, %164 : vector<2x64xf32>
    %166 = vector.extract_strided_slice %165 {offsets = [0, 0], sizes = [2, 32], strides = [1, 1]} : vector<2x64xf32> to vector<2x32xf32>
    %c8_49 = arith.constant 8 : index
    %c0_50 = arith.constant 0 : index
    %167 = vector.load %arg8[%c8_49, %c0_50] : memref<16x64xf32, #tpu.memory_space<vmem>>, vector<2x32xf32>
    tpu.vector_store %arg8[%c8_49, %c0_50], %166 {strides = array<i32>} : memref<16x64xf32, #tpu.memory_space<vmem>>, vector<2x32xf32>,
    %168 = vector.extract_strided_slice %165 {offsets = [0, 32], sizes = [2, 32], strides = [1, 1]} : vector<2x64xf32> to vector<2x32xf32>
    %c6_51 = arith.constant 6 : index
    %c32_52 = arith.constant 32 : index
    %169 = vector.load %arg8[%c6_51, %c32_52] : memref<16x64xf32, #tpu.memory_space<vmem>>, vector<2x32xf32>
    tpu.vector_store %arg8[%c6_51, %c32_52], %168 {strides = array<i32>} : memref<16x64xf32, #tpu.memory_space<vmem>>, vector<2x32xf32>,
    %c10_53 = arith.constant 10 : index
    %c0_54 = arith.constant 0 : index
    %170 = vector.load %arg7[%c10_53, %c0_54] : memref<16x256xf32, #tpu.memory_space<vmem>>, vector<2x256xf32>
    %cst_55 = arith.constant dense<0.000000e+00> : vector<2x256xf32>
    %171 = tpu.matmul %165, %7, %cst_55 {dimension_numbers = #tpu.dot_dimension_numbers<[1], [0], [0], [1], [0, 0, 1, 1], [], []>} : vector<2x64xf32>, vector<64x256xf32>, vector<2x256xf32> -> vector<2x256xf32>
    %172 = arith.addf %170, %171 : vector<2x256xf32>
    %173 = vector.extract_strided_slice %172 {offsets = [0, 0], sizes = [2, 64], strides = [1, 1]} : vector<2x256xf32> to vector<2x64xf32>
    %174 = arith.negf %173 : vector<2x64xf32>
    %175 = math.exp %174 : vector<2x64xf32>
    %cst_56 = arith.constant 1.000000e+00 : f32
    %176 = vector.broadcast %cst_56 : f32 to vector<2x64xf32>
    %177 = arith.addf %176, %175 : vector<2x64xf32>
    %178 = arith.divf %176, %177 : vector<2x64xf32>
    %179 = vector.extract_strided_slice %172 {offsets = [0, 64], sizes = [2, 64], strides = [1, 1]} : vector<2x256xf32> to vector<2x64xf32>
    %180 = arith.negf %179 : vector<2x64xf32>
    %181 = math.exp %180 : vector<2x64xf32>
    %cst_57 = arith.constant 1.000000e+00 : f32
    %182 = vector.broadcast %cst_57 : f32 to vector<2x64xf32>
    %183 = arith.addf %182, %181 : vector<2x64xf32>
    %184 = arith.divf %182, %183 : vector<2x64xf32>
    %185 = vector.extract_strided_slice %172 {offsets = [0, 128], sizes = [2, 64], strides = [1, 1]} : vector<2x256xf32> to vector<2x64xf32>
    %186 = math.tanh %185 : vector<2x64xf32>
    %187 = vector.extract_strided_slice %172 {offsets = [0, 192], sizes = [2, 64], strides = [1, 1]} : vector<2x256xf32> to vector<2x64xf32>
    %188 = arith.negf %187 : vector<2x64xf32>
    %189 = math.exp %188 : vector<2x64xf32>
    %cst_58 = arith.constant 1.000000e+00 : f32
    %190 = vector.broadcast %cst_58 : f32 to vector<2x64xf32>
    %191 = arith.addf %190, %189 : vector<2x64xf32>
    %192 = arith.divf %190, %191 : vector<2x64xf32>
    %193 = arith.mulf %184, %163 : vector<2x64xf32>
    %194 = arith.mulf %178, %186 : vector<2x64xf32>
    %195 = arith.addf %193, %194 : vector<2x64xf32>
    %196 = math.tanh %195 : vector<2x64xf32>
    %197 = arith.mulf %192, %196 : vector<2x64xf32>
    %198 = vector.extract_strided_slice %197 {offsets = [0, 0], sizes = [2, 32], strides = [1, 1]} : vector<2x64xf32> to vector<2x32xf32>
    %c10_59 = arith.constant 10 : index
    %c0_60 = arith.constant 0 : index
    %199 = vector.load %arg8[%c10_59, %c0_60] : memref<16x64xf32, #tpu.memory_space<vmem>>, vector<2x32xf32>
    tpu.vector_store %arg8[%c10_59, %c0_60], %198 {strides = array<i32>} : memref<16x64xf32, #tpu.memory_space<vmem>>, vector<2x32xf32>,
    %200 = vector.extract_strided_slice %197 {offsets = [0, 32], sizes = [2, 32], strides = [1, 1]} : vector<2x64xf32> to vector<2x32xf32>
    %c4_61 = arith.constant 4 : index
    %c32_62 = arith.constant 32 : index
    %201 = vector.load %arg8[%c4_61, %c32_62] : memref<16x64xf32, #tpu.memory_space<vmem>>, vector<2x32xf32>
    tpu.vector_store %arg8[%c4_61, %c32_62], %200 {strides = array<i32>} : memref<16x64xf32, #tpu.memory_space<vmem>>, vector<2x32xf32>,
    %c12_63 = arith.constant 12 : index
    %c0_64 = arith.constant 0 : index
    %202 = vector.load %arg7[%c12_63, %c0_64] : memref<16x256xf32, #tpu.memory_space<vmem>>, vector<2x256xf32>
    %cst_65 = arith.constant dense<0.000000e+00> : vector<2x256xf32>
    %203 = tpu.matmul %197, %7, %cst_65 {dimension_numbers = #tpu.dot_dimension_numbers<[1], [0], [0], [1], [0, 0, 1, 1], [], []>} : vector<2x64xf32>, vector<64x256xf32>, vector<2x256xf32> -> vector<2x256xf32>
    %204 = arith.addf %202, %203 : vector<2x256xf32>
    %205 = vector.extract_strided_slice %204 {offsets = [0, 0], sizes = [2, 64], strides = [1, 1]} : vector<2x256xf32> to vector<2x64xf32>
    %206 = arith.negf %205 : vector<2x64xf32>
    %207 = math.exp %206 : vector<2x64xf32>
    %cst_66 = arith.constant 1.000000e+00 : f32
    %208 = vector.broadcast %cst_66 : f32 to vector<2x64xf32>
    %209 = arith.addf %208, %207 : vector<2x64xf32>
    %210 = arith.divf %208, %209 : vector<2x64xf32>
    %211 = vector.extract_strided_slice %204 {offsets = [0, 64], sizes = [2, 64], strides = [1, 1]} : vector<2x256xf32> to vector<2x64xf32>
    %212 = arith.negf %211 : vector<2x64xf32>
    %213 = math.exp %212 : vector<2x64xf32>
    %cst_67 = arith.constant 1.000000e+00 : f32
    %214 = vector.broadcast %cst_67 : f32 to vector<2x64xf32>
    %215 = arith.addf %214, %213 : vector<2x64xf32>
    %216 = arith.divf %214, %215 : vector<2x64xf32>
    %217 = vector.extract_strided_slice %204 {offsets = [0, 128], sizes = [2, 64], strides = [1, 1]} : vector<2x256xf32> to vector<2x64xf32>
    %218 = math.tanh %217 : vector<2x64xf32>
    %219 = vector.extract_strided_slice %204 {offsets = [0, 192], sizes = [2, 64], strides = [1, 1]} : vector<2x256xf32> to vector<2x64xf32>
    %220 = arith.negf %219 : vector<2x64xf32>
    %221 = math.exp %220 : vector<2x64xf32>
    %cst_68 = arith.constant 1.000000e+00 : f32
    %222 = vector.broadcast %cst_68 : f32 to vector<2x64xf32>
    %223 = arith.addf %222, %221 : vector<2x64xf32>
    %224 = arith.divf %222, %223 : vector<2x64xf32>
    %225 = arith.mulf %216, %195 : vector<2x64xf32>
    %226 = arith.mulf %210, %218 : vector<2x64xf32>
    %227 = arith.addf %225, %226 : vector<2x64xf32>
    %228 = math.tanh %227 : vector<2x64xf32>
    %229 = arith.mulf %224, %228 : vector<2x64xf32>
    %230 = vector.extract_strided_slice %229 {offsets = [0, 0], sizes = [2, 32], strides = [1, 1]} : vector<2x64xf32> to vector<2x32xf32>
    %c12_69 = arith.constant 12 : index
    %c0_70 = arith.constant 0 : index
    %231 = vector.load %arg8[%c12_69, %c0_70] : memref<16x64xf32, #tpu.memory_space<vmem>>, vector<2x32xf32>
    tpu.vector_store %arg8[%c12_69, %c0_70], %230 {strides = array<i32>} : memref<16x64xf32, #tpu.memory_space<vmem>>, vector<2x32xf32>,
    %232 = vector.extract_strided_slice %229 {offsets = [0, 32], sizes = [2, 32], strides = [1, 1]} : vector<2x64xf32> to vector<2x32xf32>
    %c2_71 = arith.constant 2 : index
    %c32_72 = arith.constant 32 : index
    %233 = vector.load %arg8[%c2_71, %c32_72] : memref<16x64xf32, #tpu.memory_space<vmem>>, vector<2x32xf32>
    tpu.vector_store %arg8[%c2_71, %c32_72], %232 {strides = array<i32>} : memref<16x64xf32, #tpu.memory_space<vmem>>, vector<2x32xf32>,
    %c14_73 = arith.constant 14 : index
    %c0_74 = arith.constant 0 : index
    %234 = vector.load %arg7[%c14_73, %c0_74] : memref<16x256xf32, #tpu.memory_space<vmem>>, vector<2x256xf32>
    %cst_75 = arith.constant dense<0.000000e+00> : vector<2x256xf32>
    %235 = tpu.matmul %229, %7, %cst_75 {dimension_numbers = #tpu.dot_dimension_numbers<[1], [0], [0], [1], [0, 0, 1, 1], [], []>} : vector<2x64xf32>, vector<64x256xf32>, vector<2x256xf32> -> vector<2x256xf32>
    %236 = arith.addf %234, %235 : vector<2x256xf32>
    %237 = vector.extract_strided_slice %236 {offsets = [0, 0], sizes = [2, 64], strides = [1, 1]} : vector<2x256xf32> to vector<2x64xf32>
    %238 = arith.negf %237 : vector<2x64xf32>
    %239 = math.exp %238 : vector<2x64xf32>
    %cst_76 = arith.constant 1.000000e+00 : f32
    %240 = vector.broadcast %cst_76 : f32 to vector<2x64xf32>
    %241 = arith.addf %240, %239 : vector<2x64xf32>
    %242 = arith.divf %240, %241 : vector<2x64xf32>
    %243 = vector.extract_strided_slice %236 {offsets = [0, 64], sizes = [2, 64], strides = [1, 1]} : vector<2x256xf32> to vector<2x64xf32>
    %244 = arith.negf %243 : vector<2x64xf32>
    %245 = math.exp %244 : vector<2x64xf32>
    %cst_77 = arith.constant 1.000000e+00 : f32
    %246 = vector.broadcast %cst_77 : f32 to vector<2x64xf32>
    %247 = arith.addf %246, %245 : vector<2x64xf32>
    %248 = arith.divf %246, %247 : vector<2x64xf32>
    %249 = vector.extract_strided_slice %236 {offsets = [0, 128], sizes = [2, 64], strides = [1, 1]} : vector<2x256xf32> to vector<2x64xf32>
    %250 = math.tanh %249 : vector<2x64xf32>
    %251 = vector.extract_strided_slice %236 {offsets = [0, 192], sizes = [2, 64], strides = [1, 1]} : vector<2x256xf32> to vector<2x64xf32>
    %252 = arith.negf %251 : vector<2x64xf32>
    %253 = math.exp %252 : vector<2x64xf32>
    %cst_78 = arith.constant 1.000000e+00 : f32
    %254 = vector.broadcast %cst_78 : f32 to vector<2x64xf32>
    %255 = arith.addf %254, %253 : vector<2x64xf32>
    %256 = arith.divf %254, %255 : vector<2x64xf32>
    %257 = arith.mulf %248, %227 : vector<2x64xf32>
    %258 = arith.mulf %242, %250 : vector<2x64xf32>
    %259 = arith.addf %257, %258 : vector<2x64xf32>
    %260 = math.tanh %259 : vector<2x64xf32>
    %261 = arith.mulf %256, %260 : vector<2x64xf32>
    %262 = vector.extract_strided_slice %261 {offsets = [0, 0], sizes = [2, 32], strides = [1, 1]} : vector<2x64xf32> to vector<2x32xf32>
    %c14_79 = arith.constant 14 : index
    %c0_80 = arith.constant 0 : index
    %263 = vector.load %arg8[%c14_79, %c0_80] : memref<16x64xf32, #tpu.memory_space<vmem>>, vector<2x32xf32>
    tpu.vector_store %arg8[%c14_79, %c0_80], %262 {strides = array<i32>} : memref<16x64xf32, #tpu.memory_space<vmem>>, vector<2x32xf32>,
    %264 = vector.extract_strided_slice %261 {offsets = [0, 32], sizes = [2, 32], strides = [1, 1]} : vector<2x64xf32> to vector<2x32xf32>
    %c0_81 = arith.constant 0 : index
    %c32_82 = arith.constant 32 : index
    %265 = vector.load %arg8[%c0_81, %c32_82] : memref<16x64xf32, #tpu.memory_space<vmem>>, vector<2x32xf32>
    tpu.vector_store %arg8[%c0_81, %c32_82], %264 {strides = array<i32>} : memref<16x64xf32, #tpu.memory_space<vmem>>, vector<2x32xf32>,
    %c0_83 = arith.constant 0 : index
    %c0_84 = arith.constant 0 : index
    %266 = vector.load %arg8[%c0_83, %c0_84] : memref<16x64xf32, #tpu.memory_space<vmem>>, vector<16x64xf32>
    %c0_85 = arith.constant 0 : index
    %c0_86 = arith.constant 0 : index
    %267 = vector.load %arg4[%c0_85, %c0_86] : memref<64x8xf32, #tpu.memory_space<vmem>>, vector<64x8xf32>
    %cst_87 = arith.constant dense<0.000000e+00> : vector<16x8xf32>
    %268 = tpu.matmul %266, %267, %cst_87 {dimension_numbers = #tpu.dot_dimension_numbers<[1], [0], [0], [1], [0, 0, 1, 1], [], []>} : vector<16x64xf32>, vector<64x8xf32>, vector<16x8xf32> -> vector<16x8xf32>
    %c0_88 = arith.constant 0 : index
    %c0_89 = arith.constant 0 : index
    %269 = vector.load %arg5[%c0_88, %c0_89] : memref<1x8xf32, #tpu.memory_space<vmem>>, vector<1x8xf32>
    %270 = vector.broadcast %269 : vector<1x8xf32> to vector<16x8xf32>
    %271 = arith.addf %268, %270 : vector<16x8xf32>
    %c0_90 = arith.constant 0 : index
    %c0_91 = arith.constant 0 : index
    %272 = vector.load %arg6[%c0_90, %c0_91] : memref<16x8xf32, #tpu.memory_space<vmem>>, vector<16x8xf32>
    tpu.vector_store %arg6[%c0_90, %c0_91], %271 {strides = array<i32>} : memref<16x8xf32, #tpu.memory_space<vmem>>, vector<16x8xf32>,
    return
  }
}

</mosaic_0001>

<llo_original>
// kernel: bidirectional_lstm.1
$region0: #{bidirectional_lstm.1}
  #allocation0 [shape = 'u32[]', space=smem, size = 0x4, offset = 0x4, fixed_abs, tag = 'smem constant byte address 0x4 - core index']
  #allocation1 [shape = 'u32[144,128]{1,0:T(1,128)}', space=vmem, size = 0x12000, scoped, tag = 'internal scratch']
  #allocation2 [shape = 'f32[16,256]{1,0:T(8,128)}', space=vmem, size = 0x4000, scoped, tag = 'scratch operand']
  #allocation3 [shape = 'f32[16,64]{1,0:T(8,128)}', space=vmem, size = 0x2000, scoped, tag = 'scratch operand']
  %s0 = inlined_call_operand.vmem [shape: f32[16,32], index: 0, kind: input, shape index: {}]
  %s1 = inlined_call_operand.vmem [shape: f32[32,256], index: 1, kind: input, shape index: {}]
  %s2 = inlined_call_operand.vmem [shape: f32[64,256], index: 2, kind: input, shape index: {}]
  %s3 = inlined_call_operand.vmem [shape: f32[1,256], index: 3, kind: input, shape index: {}]
  %s4 = inlined_call_operand.vmem [shape: f32[64,8], index: 4, kind: input, shape index: {}]
  %s5 = inlined_call_operand.vmem [shape: f32[1,8], index: 5, kind: input, shape index: {}]
  %s6 = inlined_call_operand.hbm [shape: f32[16,8], index: 6, kind: output, shape index: {}]
  %s7 = sld [smem:[#allocation0]]
  $region34: #{bidirectional_lstm.1} parent=0
    _
  %s9 = ssub.s32 1, %s7
  %s10 = scalar_select 0, %s9, %s7
  $region1: #{bidirectional_lstm.1} parent=0
    #allocation4 [shape = 'u8[8192]{0}', space=vmem, size = 0x2000, scoped, tag = 'output window, operand 0, single buffered']
    #allocation5 [shape = 's32[1]{0}', space=sflag, size = 0x4, scoped, tag = 'scoped memory for bidirectional_lstm.1']
    %11 = vsyncpa [#allocation5], 0
    // Predicated region
    $region2: #{bidirectional_lstm.1} parent=1 // pred_check
      _
    $region3: #{bidirectional_lstm.1} parent=1 // pred_check_branch
      %13 = sbr.rel (0) target = $region5
    $region4: #{bidirectional_lstm.1} parent=1 // pred_region
      _
    $region5: #{bidirectional_lstm.1} parent=1 // pred_fallthru
      _
    // Predicated region
    $region6: #{bidirectional_lstm.1} parent=1 // pred_check
      _
    $region7: #{bidirectional_lstm.1} parent=1 // pred_check_branch
      %15 = sbr.rel (0) target = $region9
    $region8: #{bidirectional_lstm.1} parent=1 // pred_region
      _
    $region9: #{bidirectional_lstm.1} parent=1 // pred_fallthru
      _
    // Predicated region
    $region10: #{bidirectional_lstm.1} parent=1 // pred_check
      _
    $region11: #{bidirectional_lstm.1} parent=1 // pred_check_branch
      %17 = sbr.rel (0) target = $region13
    $region12: #{bidirectional_lstm.1} parent=1 // pred_region
      _
    $region13: #{bidirectional_lstm.1} parent=1 // pred_fallthru
      _
    // Predicated region
    $region14: #{bidirectional_lstm.1} parent=1 // pred_check
      _
    $region15: #{bidirectional_lstm.1} parent=1 // pred_check_branch
      %19 = sbr.rel (0) target = $region17
    $region16: #{bidirectional_lstm.1} parent=1 // pred_region
      _
    $region17: #{bidirectional_lstm.1} parent=1 // pred_fallthru
      _
    // Predicated region
    $region18: #{bidirectional_lstm.1} parent=1 // pred_check
      _
    $region19: #{bidirectional_lstm.1} parent=1 // pred_check_branch
      %21 = sbr.rel (0) target = $region21
    $region20: #{bidirectional_lstm.1} parent=1 // pred_region
      _
    $region21: #{bidirectional_lstm.1} parent=1 // pred_fallthru
      _
    // Predicated region
    $region22: #{bidirectional_lstm.1} parent=1 // pred_check
      _
    $region23: #{bidirectional_lstm.1} parent=1 // pred_check_branch
      %23 = sbr.rel (0) target = $region25
    $region24: #{bidirectional_lstm.1} parent=1 // pred_region
      _
    $region25: #{bidirectional_lstm.1} parent=1 // pred_fallthru
      _
    %v24 = vld [vmem:[%s0] sm:$0xff]
    %v25 = vld [vmem:[%s0 + $0x8] sm:$0xff]
    %v26 = vld [vmem:[%s1] sm:$0xff]
    %v27 = vld [vmem:[%s1 + $0x8] sm:$0xff]
    %v28 = vld [vmem:[%s1 + $0x10] sm:$0xff]
    %v29 = vld [vmem:[%s1 + $0x18] sm:$0xff]
    %v30 = vld [vmem:[%s1 + $0x20] sm:$0xff]
    %v31 = vld [vmem:[%s1 + $0x28] sm:$0xff]
    %v32 = vld [vmem:[%s1 + $0x30] sm:$0xff]
    %v33 = vld [vmem:[%s1 + $0x38] sm:$0xff]
    %v34 = vld [vmem:[%s3] sm:$0x3]
    %v36 = vlaneseq
    %v37 = vshrl.u32 %v36, 7
    %v38 = vsub.s32 0, %v37
    %v39 = vrot.slane %v34, %v38
    %v40 = vlaneseq
    %v41 = vshrl.u32 %v40, 7
    %v42 = vsub.s32 1, %v41
    %v43 = vrot.slane %v34, %v42
    %vm46 = vcmask 261120
    %v48 = vsel %vm46, %v24, 0
    %v51 = vsel %vm46, %v25, 0
    %53 = vmatprep.subr.mxu0 %v27
    %54 = vmatpush1.msra.mxu0 %v26
    %55 = vmatprep.subr.mxu0 %v29
    %56 = vmatpush1.msra.mxu0 %v28
    %57 = vmatprep.subr.mxu0 %v31
    %58 = vmatpush1.msra.mxu0 %v30
    %59 = vmatprep.subr.mxu0 %v33
    %60 = vmatpush1.msra.mxu0 %v32
    %61 = vmatprep.subr.mxu0 0.0
    %62 = vmatpush1.msra.mxu0 0.0
    %63 = vmatprep.subr.mxu0 0.0
    %64 = vmatpush1.msra.mxu0 0.0
    %65 = vmatprep.subr.mxu0 0.0
    %66 = vmatpush1.msra.mxu0 0.0
    %67 = vmatprep.subr.mxu0 0.0
    %68 = vmatpush1.msra.mxu0 0.0
    %69 = vmatprep.subr.mxu0 0.0
    %70 = vmatpush1.msra.mxu0 0.0
    %71 = vmatprep.subr.mxu0 0.0
    %72 = vmatpush1.msra.mxu0 0.0
    %73 = vmatprep.subr.mxu0 0.0
    %74 = vmatpush1.msra.mxu0 0.0
    %75 = vmatprep.subr.mxu0 0.0
    %76 = vmatpush1.msra.mxu0 0.0
    %77 = vmatprep.subr.mxu0 0.0
    %78 = vmatpush1.msra.mxu0 0.0
    %79 = vmatprep.subr.mxu0 0.0
    %80 = vmatpush1.msra.mxu0 0.0
    %81 = vmatprep.subr.mxu0 0.0
    %82 = vmatpush1.msra.mxu0 0.0
    %83 = vmatprep.subr.mxu0 0.0
    %84 = vmatpush1.msra.mxu0 0.0
    %85 = vmatprep.subr.mxu0 0.0
    %86 = vmatpush1.msra.mxu0 0.0
    %87 = vmatprep.subr.mxu0 0.0
    %88 = vmatpush1.msra.mxu0 0.0
    %89 = vmatprep.subr.mxu0 0.0
    %90 = vmatpush1.msra.mxu0 0.0
    %91 = vmatprep.subr.mxu0 0.0
    %92 = vmatpush1.msra.mxu0 0.0
    %93 = vmatprep.subr.mxu0 0.0
    %94 = vmatpush1.msra.mxu0 0.0
    %95 = vmatprep.subr.mxu0 0.0
    %96 = vmatpush1.msra.mxu0 0.0
    %97 = vmatprep.subr.mxu0 0.0
    %98 = vmatpush1.msra.mxu0 0.0
    %99 = vmatprep.subr.mxu0 0.0
    %100 = vmatpush1.msra.mxu0 0.0
    %101 = vmatprep.subr.mxu0 0.0
    %102 = vmatpush1.msra.mxu0 0.0
    %103 = vmatprep.subr.mxu0 0.0
    %104 = vmatpush1.msra.mxu0 0.0
    %105 = vmatprep.subr.mxu0 0.0
    %106 = vmatpush1.msra.mxu0 0.0
    %107 = vmatprep.subr.mxu0 0.0
    %108 = vmatpush1.msra.mxu0 0.0
    %109 = vmatprep.subr.mxu0 0.0
    %110 = vmatpush1.msra.mxu0 0.0
    %111 = vmatprep.subr.mxu0 0.0
    %112 = vmatpush1.msra.mxu0 0.0
    %113 = vmatprep.subr.mxu0 0.0
    %114 = vmatpush1.msra.mxu0 0.0
    %115 = vmatprep.subr.mxu0 0.0
    %116 = vmatpush1.msra.mxu0 0.0
    %117 = vmatprep.mubr.f32.mxu0 0.0
    %118 = vmatmul.mubr.f32.gmra.mrb[0].mxu0 %v48
    %v119 = vpop.f32.mrb[0].mxu0
    %v120 = vadd.f32 %v39, %v119
    %v121 = vpop.f32.mrb[0].mxu0
    %v122 = vadd.f32 %v43, %v121
    %123 = vmatprep.mubr.f32.mxu0 0.0
    %124 = vmatmul.mubr.f32.gmra.mrb[0].mxu0 %v51
    %v125 = vpop.f32.mrb[0].mxu0
    %v126 = vadd.f32 %v39, %v125
    %v127 = vpop.f32.mrb[0].mxu0
    %v128 = vadd.f32 %v43, %v127
    %129 = vdwg.mxu0
    %130 = vst [vmem:[#allocation2] sm:$0xff] %v120
    %131 = vst [vmem:[#allocation2 + $0x8] sm:$0xff] %v122
    %132 = vst [vmem:[#allocation2 + $0x10] sm:$0xff] %v126
    %133 = vst [vmem:[#allocation2 + $0x18] sm:$0xff] %v128
    %v134 = vld [vmem:[%s2] sm:$0xff]
    %v135 = vld [vmem:[%s2 + $0x8] sm:$0xff]
    %v136 = vld [vmem:[%s2 + $0x10] sm:$0xff]
    %v137 = vld [vmem:[%s2 + $0x18] sm:$0xff]
    %v138 = vld [vmem:[%s2 + $0x20] sm:$0xff]
    %v139 = vld [vmem:[%s2 + $0x28] sm:$0xff]
    %v140 = vld [vmem:[%s2 + $0x30] sm:$0xff]
    %v141 = vld [vmem:[%s2 + $0x38] sm:$0xff]
    %v142 = vld [vmem:[%s2 + $0x40] sm:$0xff]
    %v143 = vld [vmem:[%s2 + $0x48] sm:$0xff]
    %v144 = vld [vmem:[%s2 + $0x50] sm:$0xff]
    %v145 = vld [vmem:[%s2 + $0x58] sm:$0xff]
    %v146 = vld [vmem:[%s2 + $0x60] sm:$0xff]
    %v147 = vld [vmem:[%s2 + $0x68] sm:$0xff]
    %v148 = vld [vmem:[%s2 + $0x70] sm:$0xff]
    %v149 = vld [vmem:[%s2 + $0x78] sm:$0xff]
    %v150 = vld [vmem:[#allocation2] sm:$0x3]
    %v151 = vld [vmem:[#allocation2 + $0x8] sm:$0x3]
    %vm152 = vcmask 523264
    %v154 = vsel %vm152, 0.0, 0
    %156 = vmatprep.subr.mxu0 %v135
    %157 = vmatpush1.msra.mxu0 %v134
    %158 = vmatprep.subr.mxu0 %v137
    %159 = vmatpush1.msra.mxu0 %v136
    %160 = vmatprep.subr.mxu0 %v139
    %161 = vmatpush1.msra.mxu0 %v138
    %162 = vmatprep.subr.mxu0 %v141
    %163 = vmatpush1.msra.mxu0 %v140
    %164 = vmatprep.subr.mxu0 %v143
    %165 = vmatpush1.msra.mxu0 %v142
    %166 = vmatprep.subr.mxu0 %v145
    %167 = vmatpush1.msra.mxu0 %v144
    %168 = vmatprep.subr.mxu0 %v147
    %169 = vmatpush1.msra.mxu0 %v146
    %170 = vmatprep.subr.mxu0 %v149
    %171 = vmatpush1.msra.mxu0 %v148
    %172 = vmatprep.subr.mxu0 0.0
    %173 = vmatpush1.msra.mxu0 0.0
    %174 = vmatprep.subr.mxu0 0.0
    %175 = vmatpush1.msra.mxu0 0.0
    %176 = vmatprep.subr.mxu0 0.0
    %177 = vmatpush1.msra.mxu0 0.0
    %178 = vmatprep.subr.mxu0 0.0
    %179 = vmatpush1.msra.mxu0 0.0
    %180 = vmatprep.subr.mxu0 0.0
    %181 = vmatpush1.msra.mxu0 0.0
    %182 = vmatprep.subr.mxu0 0.0
    %183 = vmatpush1.msra.mxu0 0.0
    %184 = vmatprep.subr.mxu0 0.0
    %185 = vmatpush1.msra.mxu0 0.0
    %186 = vmatprep.subr.mxu0 0.0
    %187 = vmatpush1.msra.mxu0 0.0
    %188 = vmatprep.subr.mxu0 0.0
    %189 = vmatpush1.msra.mxu0 0.0
    %190 = vmatprep.subr.mxu0 0.0
    %191 = vmatpush1.msra.mxu0 0.0
    %192 = vmatprep.subr.mxu0 0.0
    %193 = vmatpush1.msra.mxu0 0.0
    %194 = vmatprep.subr.mxu0 0.0
    %195 = vmatpush1.msra.mxu0 0.0
    %196 = vmatprep.subr.mxu0 0.0
    %197 = vmatpush1.msra.mxu0 0.0
    %198 = vmatprep.subr.mxu0 0.0
    %199 = vmatpush1.msra.mxu0 0.0
    %200 = vmatprep.subr.mxu0 0.0
    %201 = vmatpush1.msra.mxu0 0.0
    %202 = vmatprep.subr.mxu0 0.0
    %203 = vmatpush1.msra.mxu0 0.0
    %204 = vmatprep.subr.mxu0 0.0
    %205 = vmatpush1.msra.mxu0 0.0
    %206 = vmatprep.subr.mxu0 0.0
    %207 = vmatpush1.msra.mxu0 0.0
    %208 = vmatprep.subr.mxu0 0.0
    %209 = vmatpush1.msra.mxu0 0.0
    %210 = vmatprep.subr.mxu0 0.0
    %211 = vmatpush1.msra.mxu0 0.0
    %212 = vmatprep.subr.mxu0 0.0
    %213 = vmatpush1.msra.mxu0 0.0
    %214 = vmatprep.subr.mxu0 0.0
    %215 = vmatpush1.msra.mxu0 0.0
    %216 = vmatprep.subr.mxu0 0.0
    %217 = vmatpush1.msra.mxu0 0.0
    %218 = vmatprep.subr.mxu0 0.0
    %219 = vmatpush1.msra.mxu0 0.0
    %220 = vmatprep.mubr.f32.mxu0 0.0
    %221 = vmatmul.mubr.f32.gmra.mrb[0].mxu0 %v154
    %v222 = vpop.f32.mrb[0].mxu0
    %v223 = vadd.f32 0.0, %v222
    %v224 = vpop.f32.mrb[0].mxu0
    %v225 = vadd.f32 0.0, %v224
    %226 = vdwg.mxu0
    %v227 = vadd.f32 %v150, %v223
    %v228 = vadd.f32 %v151, %v225
    %v229 = vxor.u32 %v227, 2147483648
    %v230 = vmul.f32 %v229, 1.442695
    %v231 = vpow.pop %v230
    %v232 = vadd.f32 %v231, 1.0
    %v233 = vrcp.pop %v232
    %v234 = vmul.f32 1.0, %v233
    %v235 = vtanh.pop %v228
    %v236 = vxor.u32 %v228, 2147483648
    %v237 = vmul.f32 %v236, 1.442695
    %v238 = vpow.pop %v237
    %v239 = vadd.f32 %v238, 1.0
    %v240 = vrcp.pop %v239
    %v241 = vmul.f32 1.0, %v240
    %v242 = vmul.f32 %v234, 0.0
    %v243 = vmul.f32 %v234, %v235
    %245 = vrot.lane.b32.xlu0 %v243, 64
    %v246 = vpop.permute.xlu0 %245
    %v248 = vadd.f32 %v242, %v246
    %v249 = vtanh.pop %v248
    %v250 = vmul.f32 %v241, %v249
    %252 = vrot.lane.b32.xlu0 %v250, 64
    %v253 = vpop.permute.xlu0 %252
    %vm255 = vcmask 254976
    %256 = vst.msk [vmem:[#allocation3] sm:$0x3] %vm255, %v253
    %vm257 = vcmask 517376
    %258 = vst.msk [vmem:[#allocation3 + $0xe] sm:$0x3] %vm257, %v253
    %v259 = vld [vmem:[#allocation2] sm:$0xc]
    %v260 = vld [vmem:[#allocation2 + $0x8] sm:$0xc]
    %v261 = vsel %vm152, %v253, 0
    %263 = vmatprep.subr.mxu0 %v135
    %264 = vmatpush1.msra.mxu0 %v134
    %265 = vmatprep.subr.mxu0 %v137
    %266 = vmatpush1.msra.mxu0 %v136
    %267 = vmatprep.subr.mxu0 %v139
    %268 = vmatpush1.msra.mxu0 %v138
    %269 = vmatprep.subr.mxu0 %v141
    %270 = vmatpush1.msra.mxu0 %v140
    %271 = vmatprep.subr.mxu0 %v143
    %272 = vmatpush1.msra.mxu0 %v142
    %273 = vmatprep.subr.mxu0 %v145
    %274 = vmatpush1.msra.mxu0 %v144
    %275 = vmatprep.subr.mxu0 %v147
    %276 = vmatpush1.msra.mxu0 %v146
    %277 = vmatprep.subr.mxu0 %v149
    %278 = vmatpush1.msra.mxu0 %v148
    %279 = vmatprep.subr.mxu0 0.0
    %280 = vmatpush1.msra.mxu0 0.0
    %281 = vmatprep.subr.mxu0 0.0
    %282 = vmatpush1.msra.mxu0 0.0
    %283 = vmatprep.subr.mxu0 0.0
    %284 = vmatpush1.msra.mxu0 0.0
    %285 = vmatprep.subr.mxu0 0.0
    %286 = vmatpush1.msra.mxu0 0.0
    %287 = vmatprep.subr.mxu0 0.0
    %288 = vmatpush1.msra.mxu0 0.0
    %289 = vmatprep.subr.mxu0 0.0
    %290 = vmatpush1.msra.mxu0 0.0
    %291 = vmatprep.subr.mxu0 0.0
    %292 = vmatpush1.msra.mxu0 0.0
    %293 = vmatprep.subr.mxu0 0.0
    %294 = vmatpush1.msra.mxu0 0.0
    %295 = vmatprep.subr.mxu0 0.0
    %296 = vmatpush1.msra.mxu0 0.0
    %297 = vmatprep.subr.mxu0 0.0
    %298 = vmatpush1.msra.mxu0 0.0
    %299 = vmatprep.subr.mxu0 0.0
    %300 = vmatpush1.msra.mxu0 0.0
    %301 = vmatprep.subr.mxu0 0.0
    %302 = vmatpush1.msra.mxu0 0.0
    %303 = vmatprep.subr.mxu0 0.0
    %304 = vmatpush1.msra.mxu0 0.0
    %305 = vmatprep.subr.mxu0 0.0
    %306 = vmatpush1.msra.mxu0 0.0
    %307 = vmatprep.subr.mxu0 0.0
    %308 = vmatpush1.msra.mxu0 0.0
    %309 = vmatprep.subr.mxu0 0.0
    %310 = vmatpush1.msra.mxu0 0.0
    %311 = vmatprep.subr.mxu0 0.0
    %312 = vmatpush1.msra.mxu0 0.0
    %313 = vmatprep.subr.mxu0 0.0
    %314 = vmatpush1.msra.mxu0 0.0
    %315 = vmatprep.subr.mxu0 0.0
    %316 = vmatpush1.msra.mxu0 0.0
    %317 = vmatprep.subr.mxu0 0.0
    %318 = vmatpush1.msra.mxu0 0.0
    %319 = vmatprep.subr.mxu0 0.0
    %320 = vmatpush1.msra.mxu0 0.0
    %321 = vmatprep.subr.mxu0 0.0
    %322 = vmatpush1.msra.mxu0 0.0
    %323 = vmatprep.subr.mxu0 0.0
    %324 = vmatpush1.msra.mxu0 0.0
    %325 = vmatprep.subr.mxu0 0.0
    %326 = vmatpush1.msra.mxu0 0.0
    %327 = vmatprep.mubr.f32.mxu0 0.0
    %328 = vmatmul.mubr.f32.gmra.mrb[0].mxu0 %v261
    %v329 = vpop.f32.mrb[0].mxu0
    %v330 = vadd.f32 0.0, %v329
    %v331 = vpop.f32.mrb[0].mxu0
    %v332 = vadd.f32 0.0, %v331
    %333 = vdwg.mxu0
    %v336 = vrot.slane %v330, 6
    %v337 = vrot.slane %v332, 6
    %v340 = vadd.f32 %v259, %v336
    %v341 = vadd.f32 %v260, %v337
    %v342 = vxor.u32 %v340, 2147483648
    %v343 = vmul.f32 %v342, 1.442695
    %v344 = vpow.pop %v343
    %v345 = vadd.f32 %v344, 1.0
    %v346 = vrcp.pop %v345
    %v347 = vmul.f32 1.0, %v346
    %v348 = vtanh.pop %v341
    %v349 = vxor.u32 %v341, 2147483648
    %v350 = vmul.f32 %v349, 1.442695
    %v351 = vpow.pop %v350
    %v352 = vadd.f32 %v351, 1.0
    %v353 = vrcp.pop %v352
    %v354 = vmul.f32 1.0, %v353
    %v356 = vrot.slane %v248, 6
    %v358 = vmul.f32 %v347, %v356
    %v359 = vmul.f32 %v347, %v348
    %361 = vrot.lane.b32.xlu0 %v359, 64
    %v362 = vpop.permute.xlu0 %361
    %v364 = vadd.f32 %v358, %v362
    %v365 = vtanh.pop %v364
    %v366 = vmul.f32 %v354, %v365
    %368 = vrot.lane.b32.xlu0 %v366, 64
    %v369 = vpop.permute.xlu0 %368
    %vm371 = vcmask 257026
    %372 = vst.msk [vmem:[#allocation3] sm:$0xc] %vm371, %v369
    %vm373 = vcmask 519426
    %374 = vst.msk [vmem:[#allocation3 + $0xa] sm:$0xc] %vm373, %v369
    %v375 = vld [vmem:[#allocation2] sm:$0x30]
    %v376 = vld [vmem:[#allocation2 + $0x8] sm:$0x30]
    %v377 = vrot.slane %v366, 2
    %378 = vrot.lane.b32.xlu0 %v377, 64
    %v379 = vpop.permute.xlu0 %378
    %v380 = vsel %vm152, %v379, 0
    %382 = vmatprep.subr.mxu0 %v135
    %383 = vmatpush1.msra.mxu0 %v134
    %384 = vmatprep.subr.mxu0 %v137
    %385 = vmatpush1.msra.mxu0 %v136
    %386 = vmatprep.subr.mxu0 %v139
    %387 = vmatpush1.msra.mxu0 %v138
    %388 = vmatprep.subr.mxu0 %v141
    %389 = vmatpush1.msra.mxu0 %v140
    %390 = vmatprep.subr.mxu0 %v143
    %391 = vmatpush1.msra.mxu0 %v142
    %392 = vmatprep.subr.mxu0 %v145
    %393 = vmatpush1.msra.mxu0 %v144
    %394 = vmatprep.subr.mxu0 %v147
    %395 = vmatpush1.msra.mxu0 %v146
    %396 = vmatprep.subr.mxu0 %v149
    %397 = vmatpush1.msra.mxu0 %v148
    %398 = vmatprep.subr.mxu0 0.0
    %399 = vmatpush1.msra.mxu0 0.0
    %400 = vmatprep.subr.mxu0 0.0
    %401 = vmatpush1.msra.mxu0 0.0
    %402 = vmatprep.subr.mxu0 0.0
    %403 = vmatpush1.msra.mxu0 0.0
    %404 = vmatprep.subr.mxu0 0.0
    %405 = vmatpush1.msra.mxu0 0.0
    %406 = vmatprep.subr.mxu0 0.0
    %407 = vmatpush1.msra.mxu0 0.0
    %408 = vmatprep.subr.mxu0 0.0
    %409 = vmatpush1.msra.mxu0 0.0
    %410 = vmatprep.subr.mxu0 0.0
    %411 = vmatpush1.msra.mxu0 0.0
    %412 = vmatprep.subr.mxu0 0.0
    %413 = vmatpush1.msra.mxu0 0.0
    %414 = vmatprep.subr.mxu0 0.0
    %415 = vmatpush1.msra.mxu0 0.0
    %416 = vmatprep.subr.mxu0 0.0
    %417 = vmatpush1.msra.mxu0 0.0
    %418 = vmatprep.subr.mxu0 0.0
    %419 = vmatpush1.msra.mxu0 0.0
    %420 = vmatprep.subr.mxu0 0.0
    %421 = vmatpush1.msra.mxu0 0.0
    %422 = vmatprep.subr.mxu0 0.0
    %423 = vmatpush1.msra.mxu0 0.0
    %424 = vmatprep.subr.mxu0 0.0
    %425 = vmatpush1.msra.mxu0 0.0
    %426 = vmatprep.subr.mxu0 0.0
    %427 = vmatpush1.msra.mxu0 0.0
    %428 = vmatprep.subr.mxu0 0.0
    %429 = vmatpush1.msra.mxu0 0.0
    %430 = vmatprep.subr.mxu0 0.0
    %431 = vmatpush1.msra.mxu0 0.0
    %432 = vmatprep.subr.mxu0 0.0
    %433 = vmatpush1.msra.mxu0 0.0
    %434 = vmatprep.subr.mxu0 0.0
    %435 = vmatpush1.msra.mxu0 0.0
    %436 = vmatprep.subr.mxu0 0.0
    %437 = vmatpush1.msra.mxu0 0.0
    %438 = vmatprep.subr.mxu0 0.0
    %439 = vmatpush1.msra.mxu0 0.0
    %440 = vmatprep.subr.mxu0 0.0
    %441 = vmatpush1.msra.mxu0 0.0
    %442 = vmatprep.subr.mxu0 0.0
    %443 = vmatpush1.msra.mxu0 0.0
    %444 = vmatprep.subr.mxu0 0.0
    %445 = vmatpush1.msra.mxu0 0.0
    %446 = vmatprep.mubr.f32.mxu0 0.0
    %447 = vmatmul.mubr.f32.gmra.mrb[0].mxu0 %v380
    %v448 = vpop.f32.mrb[0].mxu0
    %v449 = vadd.f32 0.0, %v448
    %v450 = vpop.f32.mrb[0].mxu0
    %v451 = vadd.f32 0.0, %v450
    %452 = vdwg.mxu0
    %v455 = vrot.slane %v449, 4
    %v456 = vrot.slane %v451, 4
    %v459 = vadd.f32 %v375, %v455
    %v460 = vadd.f32 %v376, %v456
    %v461 = vxor.u32 %v459, 2147483648
    %v462 = vmul.f32 %v461, 1.442695
    %v463 = vpow.pop %v462
    %v464 = vadd.f32 %v463, 1.0
    %v465 = vrcp.pop %v464
    %v466 = vmul.f32 1.0, %v465
    %v467 = vtanh.pop %v460
    %v468 = vxor.u32 %v460, 2147483648
    %v469 = vmul.f32 %v468, 1.442695
    %v470 = vpow.pop %v469
    %v471 = vadd.f32 %v470, 1.0
    %v472 = vrcp.pop %v471
    %v473 = vmul.f32 1.0, %v472
    %v475 = vrot.slane %v364, 6
    %v477 = vmul.f32 %v466, %v475
    %v478 = vmul.f32 %v466, %v467
    %480 = vrot.lane.b32.xlu0 %v478, 64
    %v481 = vpop.permute.xlu0 %480
    %v483 = vadd.f32 %v477, %v481
    %v484 = vtanh.pop %v483
    %v485 = vmul.f32 %v473, %v484
    %487 = vrot.lane.b32.xlu0 %v485, 64
    %v488 = vpop.permute.xlu0 %487
    %vm490 = vcmask 259076
    %491 = vst.msk [vmem:[#allocation3] sm:$0x30] %vm490, %v488
    %vm492 = vcmask 521476
    %493 = vst.msk [vmem:[#allocation3 + $0x6] sm:$0x30] %vm492, %v488
    %v494 = vld [vmem:[#allocation2] sm:$0xc0]
    %v495 = vld [vmem:[#allocation2 + $0x8] sm:$0xc0]
    %v496 = vrot.slane %v485, 4
    %497 = vrot.lane.b32.xlu0 %v496, 64
    %v498 = vpop.permute.xlu0 %497
    %v499 = vsel %vm152, %v498, 0
    %501 = vmatprep.subr.mxu0 %v135
    %502 = vmatpush1.msra.mxu0 %v134
    %503 = vmatprep.subr.mxu0 %v137
    %504 = vmatpush1.msra.mxu0 %v136
    %505 = vmatprep.subr.mxu0 %v139
    %506 = vmatpush1.msra.mxu0 %v138
    %507 = vmatprep.subr.mxu0 %v141
    %508 = vmatpush1.msra.mxu0 %v140
    %509 = vmatprep.subr.mxu0 %v143
    %510 = vmatpush1.msra.mxu0 %v142
    %511 = vmatprep.subr.mxu0 %v145
    %512 = vmatpush1.msra.mxu0 %v144
    %513 = vmatprep.subr.mxu0 %v147
    %514 = vmatpush1.msra.mxu0 %v146
    %515 = vmatprep.subr.mxu0 %v149
    %516 = vmatpush1.msra.mxu0 %v148
    %517 = vmatprep.subr.mxu0 0.0
    %518 = vmatpush1.msra.mxu0 0.0
    %519 = vmatprep.subr.mxu0 0.0
    %520 = vmatpush1.msra.mxu0 0.0
    %521 = vmatprep.subr.mxu0 0.0
    %522 = vmatpush1.msra.mxu0 0.0
    %523 = vmatprep.subr.mxu0 0.0
    %524 = vmatpush1.msra.mxu0 0.0
    %525 = vmatprep.subr.mxu0 0.0
    %526 = vmatpush1.msra.mxu0 0.0
    %527 = vmatprep.subr.mxu0 0.0
    %528 = vmatpush1.msra.mxu0 0.0
    %529 = vmatprep.subr.mxu0 0.0
    %530 = vmatpush1.msra.mxu0 0.0
    %531 = vmatprep.subr.mxu0 0.0
    %532 = vmatpush1.msra.mxu0 0.0
    %533 = vmatprep.subr.mxu0 0.0
    %534 = vmatpush1.msra.mxu0 0.0
    %535 = vmatprep.subr.mxu0 0.0
    %536 = vmatpush1.msra.mxu0 0.0
    %537 = vmatprep.subr.mxu0 0.0
    %538 = vmatpush1.msra.mxu0 0.0
    %539 = vmatprep.subr.mxu0 0.0
    %540 = vmatpush1.msra.mxu0 0.0
    %541 = vmatprep.subr.mxu0 0.0
    %542 = vmatpush1.msra.mxu0 0.0
    %543 = vmatprep.subr.mxu0 0.0
    %544 = vmatpush1.msra.mxu0 0.0
    %545 = vmatprep.subr.mxu0 0.0
    %546 = vmatpush1.msra.mxu0 0.0
    %547 = vmatprep.subr.mxu0 0.0
    %548 = vmatpush1.msra.mxu0 0.0
    %549 = vmatprep.subr.mxu0 0.0
    %550 = vmatpush1.msra.mxu0 0.0
    %551 = vmatprep.subr.mxu0 0.0
    %552 = vmatpush1.msra.mxu0 0.0
    %553 = vmatprep.subr.mxu0 0.0
    %554 = vmatpush1.msra.mxu0 0.0
    %555 = vmatprep.subr.mxu0 0.0
    %556 = vmatpush1.msra.mxu0 0.0
    %557 = vmatprep.subr.mxu0 0.0
    %558 = vmatpush1.msra.mxu0 0.0
    %559 = vmatprep.subr.mxu0 0.0
    %560 = vmatpush1.msra.mxu0 0.0
    %561 = vmatprep.subr.mxu0 0.0
    %562 = vmatpush1.msra.mxu0 0.0
    %563 = vmatprep.subr.mxu0 0.0
    %564 = vmatpush1.msra.mxu0 0.0
    %565 = vmatprep.mubr.f32.mxu0 0.0
    %566 = vmatmul.mubr.f32.gmra.mrb[0].mxu0 %v499
    %v567 = vpop.f32.mrb[0].mxu0
    %v568 = vadd.f32 0.0, %v567
    %v569 = vpop.f32.mrb[0].mxu0
    %v570 = vadd.f32 0.0, %v569
    %571 = vdwg.mxu0
    %v574 = vrot.slane %v568, 2
    %v575 = vrot.slane %v570, 2
    %v578 = vadd.f32 %v494, %v574
    %v579 = vadd.f32 %v495, %v575
    %v580 = vxor.u32 %v578, 2147483648
    %v581 = vmul.f32 %v580, 1.442695
    %v582 = vpow.pop %v581
    %v583 = vadd.f32 %v582, 1.0
    %v584 = vrcp.pop %v583
    %v585 = vmul.f32 1.0, %v584
    %v586 = vtanh.pop %v579
    %v587 = vxor.u32 %v579, 2147483648
    %v588 = vmul.f32 %v587, 1.442695
    %v589 = vpow.pop %v588
    %v590 = vadd.f32 %v589, 1.0
    %v591 = vrcp.pop %v590
    %v592 = vmul.f32 1.0, %v591
    %v594 = vrot.slane %v483, 6
    %v596 = vmul.f32 %v585, %v594
    %v597 = vmul.f32 %v585, %v586
    %599 = vrot.lane.b32.xlu0 %v597, 64
    %v600 = vpop.permute.xlu0 %599
    %v602 = vadd.f32 %v596, %v600
    %v603 = vtanh.pop %v602
    %v604 = vmul.f32 %v592, %v603
    %606 = vrot.lane.b32.xlu0 %v604, 64
    %v607 = vpop.permute.xlu0 %606
    %vm609 = vcmask 261126
    %610 = vst.msk [vmem:[#allocation3] sm:$0xc0] %vm609, %v607
    %vm611 = vcmask 523526
    %612 = vst.msk [vmem:[#allocation3 + $0x2] sm:$0xc0] %vm611, %v607
    %v613 = vld [vmem:[#allocation2 + $0x10] sm:$0x3]
    %v614 = vld [vmem:[#allocation2 + $0x18] sm:$0x3]
    %v615 = vrot.slane %v604, 6
    %616 = vrot.lane.b32.xlu0 %v615, 64
    %v617 = vpop.permute.xlu0 %616
    %v618 = vsel %vm152, %v617, 0
    %620 = vmatprep.subr.mxu0 %v135
    %621 = vmatpush1.msra.mxu0 %v134
    %622 = vmatprep.subr.mxu0 %v137
    %623 = vmatpush1.msra.mxu0 %v136
    %624 = vmatprep.subr.mxu0 %v139
    %625 = vmatpush1.msra.mxu0 %v138
    %626 = vmatprep.subr.mxu0 %v141
    %627 = vmatpush1.msra.mxu0 %v140
    %628 = vmatprep.subr.mxu0 %v143
    %629 = vmatpush1.msra.mxu0 %v142
    %630 = vmatprep.subr.mxu0 %v145
    %631 = vmatpush1.msra.mxu0 %v144
    %632 = vmatprep.subr.mxu0 %v147
    %633 = vmatpush1.msra.mxu0 %v146
    %634 = vmatprep.subr.mxu0 %v149
    %635 = vmatpush1.msra.mxu0 %v148
    %636 = vmatprep.subr.mxu0 0.0
    %637 = vmatpush1.msra.mxu0 0.0
    %638 = vmatprep.subr.mxu0 0.0
    %639 = vmatpush1.msra.mxu0 0.0
    %640 = vmatprep.subr.mxu0 0.0
    %641 = vmatpush1.msra.mxu0 0.0
    %642 = vmatprep.subr.mxu0 0.0
    %643 = vmatpush1.msra.mxu0 0.0
    %644 = vmatprep.subr.mxu0 0.0
    %645 = vmatpush1.msra.mxu0 0.0
    %646 = vmatprep.subr.mxu0 0.0
    %647 = vmatpush1.msra.mxu0 0.0
    %648 = vmatprep.subr.mxu0 0.0
    %649 = vmatpush1.msra.mxu0 0.0
    %650 = vmatprep.subr.mxu0 0.0
    %651 = vmatpush1.msra.mxu0 0.0
    %652 = vmatprep.subr.mxu0 0.0
    %653 = vmatpush1.msra.mxu0 0.0
    %654 = vmatprep.subr.mxu0 0.0
    %655 = vmatpush1.msra.mxu0 0.0
    %656 = vmatprep.subr.mxu0 0.0
    %657 = vmatpush1.msra.mxu0 0.0
    %658 = vmatprep.subr.mxu0 0.0
    %659 = vmatpush1.msra.mxu0 0.0
    %660 = vmatprep.subr.mxu0 0.0
    %661 = vmatpush1.msra.mxu0 0.0
    %662 = vmatprep.subr.mxu0 0.0
    %663 = vmatpush1.msra.mxu0 0.0
    %664 = vmatprep.subr.mxu0 0.0
    %665 = vmatpush1.msra.mxu0 0.0
    %666 = vmatprep.subr.mxu0 0.0
    %667 = vmatpush1.msra.mxu0 0.0
    %668 = vmatprep.subr.mxu0 0.0
    %669 = vmatpush1.msra.mxu0 0.0
    %670 = vmatprep.subr.mxu0 0.0
    %671 = vmatpush1.msra.mxu0 0.0
    %672 = vmatprep.subr.mxu0 0.0
    %673 = vmatpush1.msra.mxu0 0.0
    %674 = vmatprep.subr.mxu0 0.0
    %675 = vmatpush1.msra.mxu0 0.0
    %676 = vmatprep.subr.mxu0 0.0
    %677 = vmatpush1.msra.mxu0 0.0
    %678 = vmatprep.subr.mxu0 0.0
    %679 = vmatpush1.msra.mxu0 0.0
    %680 = vmatprep.subr.mxu0 0.0
    %681 = vmatpush1.msra.mxu0 0.0
    %682 = vmatprep.subr.mxu0 0.0
    %683 = vmatpush1.msra.mxu0 0.0
    %684 = vmatprep.mubr.f32.mxu0 0.0
    %685 = vmatmul.mubr.f32.gmra.mrb[0].mxu0 %v618
    %v686 = vpop.f32.mrb[0].mxu0
    %v687 = vadd.f32 0.0, %v686
    %v688 = vpop.f32.mrb[0].mxu0
    %v689 = vadd.f32 0.0, %v688
    %690 = vdwg.mxu0
    %v691 = vadd.f32 %v613, %v687
    %v692 = vadd.f32 %v614, %v689
    %v693 = vxor.u32 %v691, 2147483648
    %v694 = vmul.f32 %v693, 1.442695
    %v695 = vpow.pop %v694
    %v696 = vadd.f32 %v695, 1.0
    %v697 = vrcp.pop %v696
    %v698 = vmul.f32 1.0, %v697
    %v699 = vtanh.pop %v692
    %v700 = vxor.u32 %v692, 2147483648
    %v701 = vmul.f32 %v700, 1.442695
    %v702 = vpow.pop %v701
    %v703 = vadd.f32 %v702, 1.0
    %v704 = vrcp.pop %v703
    %v705 = vmul.f32 1.0, %v704
    %v707 = vrot.slane %v602, 6
    %v709 = vmul.f32 %v698, %v707
    %v710 = vmul.f32 %v698, %v699
    %712 = vrot.lane.b32.xlu0 %v710, 64
    %v713 = vpop.permute.xlu0 %712
    %v715 = vadd.f32 %v709, %v713
    %v716 = vtanh.pop %v715
    %v717 = vmul.f32 %v705, %v716
    %719 = vrot.lane.b32.xlu0 %v717, 64
    %v720 = vpop.permute.xlu0 %719
    %722 = vst.msk [vmem:[#allocation3 + $0x8] sm:$0x3] %vm255, %v720
    %723 = vst.msk [vmem:[#allocation3 + $0x6] sm:$0x3] %vm257, %v720
    %v724 = vld [vmem:[#allocation2 + $0x10] sm:$0xc]
    %v725 = vld [vmem:[#allocation2 + $0x18] sm:$0xc]
    %v726 = vsel %vm152, %v720, 0
    %728 = vmatprep.subr.mxu0 %v135
    %729 = vmatpush1.msra.mxu0 %v134
    %730 = vmatprep.subr.mxu0 %v137
    %731 = vmatpush1.msra.mxu0 %v136
    %732 = vmatprep.subr.mxu0 %v139
    %733 = vmatpush1.msra.mxu0 %v138
    %734 = vmatprep.subr.mxu0 %v141
    %735 = vmatpush1.msra.mxu0 %v140
    %736 = vmatprep.subr.mxu0 %v143
    %737 = vmatpush1.msra.mxu0 %v142
    %738 = vmatprep.subr.mxu0 %v145
    %739 = vmatpush1.msra.mxu0 %v144
    %740 = vmatprep.subr.mxu0 %v147
    %741 = vmatpush1.msra.mxu0 %v146
    %742 = vmatprep.subr.mxu0 %v149
    %743 = vmatpush1.msra.mxu0 %v148
    %744 = vmatprep.subr.mxu0 0.0
    %745 = vmatpush1.msra.mxu0 0.0
    %746 = vmatprep.subr.mxu0 0.0
    %747 = vmatpush1.msra.mxu0 0.0
    %748 = vmatprep.subr.mxu0 0.0
    %749 = vmatpush1.msra.mxu0 0.0
    %750 = vmatprep.subr.mxu0 0.0
    %751 = vmatpush1.msra.mxu0 0.0
    %752 = vmatprep.subr.mxu0 0.0
    %753 = vmatpush1.msra.mxu0 0.0
    %754 = vmatprep.subr.mxu0 0.0
    %755 = vmatpush1.msra.mxu0 0.0
    %756 = vmatprep.subr.mxu0 0.0
    %757 = vmatpush1.msra.mxu0 0.0
    %758 = vmatprep.subr.mxu0 0.0
    %759 = vmatpush1.msra.mxu0 0.0
    %760 = vmatprep.subr.mxu0 0.0
    %761 = vmatpush1.msra.mxu0 0.0
    %762 = vmatprep.subr.mxu0 0.0
    %763 = vmatpush1.msra.mxu0 0.0
    %764 = vmatprep.subr.mxu0 0.0
    %765 = vmatpush1.msra.mxu0 0.0
    %766 = vmatprep.subr.mxu0 0.0
    %767 = vmatpush1.msra.mxu0 0.0
    %768 = vmatprep.subr.mxu0 0.0
    %769 = vmatpush1.msra.mxu0 0.0
    %770 = vmatprep.subr.mxu0 0.0
    %771 = vmatpush1.msra.mxu0 0.0
    %772 = vmatprep.subr.mxu0 0.0
    %773 = vmatpush1.msra.mxu0 0.0
    %774 = vmatprep.subr.mxu0 0.0
    %775 = vmatpush1.msra.mxu0 0.0
    %776 = vmatprep.subr.mxu0 0.0
    %777 = vmatpush1.msra.mxu0 0.0
    %778 = vmatprep.subr.mxu0 0.0
    %779 = vmatpush1.msra.mxu0 0.0
    %780 = vmatprep.subr.mxu0 0.0
    %781 = vmatpush1.msra.mxu0 0.0
    %782 = vmatprep.subr.mxu0 0.0
    %783 = vmatpush1.msra.mxu0 0.0
    %784 = vmatprep.subr.mxu0 0.0
    %785 = vmatpush1.msra.mxu0 0.0
    %786 = vmatprep.subr.mxu0 0.0
    %787 = vmatpush1.msra.mxu0 0.0
    %788 = vmatprep.subr.mxu0 0.0
    %789 = vmatpush1.msra.mxu0 0.0
    %790 = vmatprep.subr.mxu0 0.0
    %791 = vmatpush1.msra.mxu0 0.0
    %792 = vmatprep.mubr.f32.mxu0 0.0
    %793 = vmatmul.mubr.f32.gmra.mrb[0].mxu0 %v726
    %v794 = vpop.f32.mrb[0].mxu0
    %v795 = vadd.f32 0.0, %v794
    %v796 = vpop.f32.mrb[0].mxu0
    %v797 = vadd.f32 0.0, %v796
    %798 = vdwg.mxu0
    %v801 = vrot.slane %v795, 6
    %v802 = vrot.slane %v797, 6
    %v805 = vadd.f32 %v724, %v801
    %v806 = vadd.f32 %v725, %v802
    %v807 = vxor.u32 %v805, 2147483648
    %v808 = vmul.f32 %v807, 1.442695
    %v809 = vpow.pop %v808
    %v810 = vadd.f32 %v809, 1.0
    %v811 = vrcp.pop %v810
    %v812 = vmul.f32 1.0, %v811
    %v813 = vtanh.pop %v806
    %v814 = vxor.u32 %v806, 2147483648
    %v815 = vmul.f32 %v814, 1.442695
    %v816 = vpow.pop %v815
    %v817 = vadd.f32 %v816, 1.0
    %v818 = vrcp.pop %v817
    %v819 = vmul.f32 1.0, %v818
    %v821 = vrot.slane %v715, 6
    %v823 = vmul.f32 %v812, %v821
    %v824 = vmul.f32 %v812, %v813
    %826 = vrot.lane.b32.xlu0 %v824, 64
    %v827 = vpop.permute.xlu0 %826
    %v829 = vadd.f32 %v823, %v827
    %v830 = vtanh.pop %v829
    %v831 = vmul.f32 %v819, %v830
    %833 = vrot.lane.b32.xlu0 %v831, 64
    %v834 = vpop.permute.xlu0 %833
    %836 = vst.msk [vmem:[#allocation3 + $0x8] sm:$0xc] %vm371, %v834
    %837 = vst.msk [vmem:[#allocation3 + $0x2] sm:$0xc] %vm373, %v834
    %v838 = vld [vmem:[#allocation2 + $0x10] sm:$0x30]
    %v839 = vld [vmem:[#allocation2 + $0x18] sm:$0x30]
    %v840 = vrot.slane %v831, 2
    %841 = vrot.lane.b32.xlu0 %v840, 64
    %v842 = vpop.permute.xlu0 %841
    %v843 = vsel %vm152, %v842, 0
    %845 = vmatprep.subr.mxu0 %v135
    %846 = vmatpush1.msra.mxu0 %v134
    %847 = vmatprep.subr.mxu0 %v137
    %848 = vmatpush1.msra.mxu0 %v136
    %849 = vmatprep.subr.mxu0 %v139
    %850 = vmatpush1.msra.mxu0 %v138
    %851 = vmatprep.subr.mxu0 %v141
    %852 = vmatpush1.msra.mxu0 %v140
    %853 = vmatprep.subr.mxu0 %v143
    %854 = vmatpush1.msra.mxu0 %v142
    %855 = vmatprep.subr.mxu0 %v145
    %856 = vmatpush1.msra.mxu0 %v144
    %857 = vmatprep.subr.mxu0 %v147
    %858 = vmatpush1.msra.mxu0 %v146
    %859 = vmatprep.subr.mxu0 %v149
    %860 = vmatpush1.msra.mxu0 %v148
    %861 = vmatprep.subr.mxu0 0.0
    %862 = vmatpush1.msra.mxu0 0.0
    %863 = vmatprep.subr.mxu0 0.0
    %864 = vmatpush1.msra.mxu0 0.0
    %865 = vmatprep.subr.mxu0 0.0
    %866 = vmatpush1.msra.mxu0 0.0
    %867 = vmatprep.subr.mxu0 0.0
    %868 = vmatpush1.msra.mxu0 0.0
    %869 = vmatprep.subr.mxu0 0.0
    %870 = vmatpush1.msra.mxu0 0.0
    %871 = vmatprep.subr.mxu0 0.0
    %872 = vmatpush1.msra.mxu0 0.0
    %873 = vmatprep.subr.mxu0 0.0
    %874 = vmatpush1.msra.mxu0 0.0
    %875 = vmatprep.subr.mxu0 0.0
    %876 = vmatpush1.msra.mxu0 0.0
    %877 = vmatprep.subr.mxu0 0.0
    %878 = vmatpush1.msra.mxu0 0.0
    %879 = vmatprep.subr.mxu0 0.0
    %880 = vmatpush1.msra.mxu0 0.0
    %881 = vmatprep.subr.mxu0 0.0
    %882 = vmatpush1.msra.mxu0 0.0
    %883 = vmatprep.subr.mxu0 0.0
    %884 = vmatpush1.msra.mxu0 0.0
    %885 = vmatprep.subr.mxu0 0.0
    %886 = vmatpush1.msra.mxu0 0.0
    %887 = vmatprep.subr.mxu0 0.0
    %888 = vmatpush1.msra.mxu0 0.0
    %889 = vmatprep.subr.mxu0 0.0
    %890 = vmatpush1.msra.mxu0 0.0
    %891 = vmatprep.subr.mxu0 0.0
    %892 = vmatpush1.msra.mxu0 0.0
    %893 = vmatprep.subr.mxu0 0.0
    %894 = vmatpush1.msra.mxu0 0.0
    %895 = vmatprep.subr.mxu0 0.0
    %896 = vmatpush1.msra.mxu0 0.0
    %897 = vmatprep.subr.mxu0 0.0
    %898 = vmatpush1.msra.mxu0 0.0
    %899 = vmatprep.subr.mxu0 0.0
    %900 = vmatpush1.msra.mxu0 0.0
    %901 = vmatprep.subr.mxu0 0.0
    %902 = vmatpush1.msra.mxu0 0.0
    %903 = vmatprep.subr.mxu0 0.0
    %904 = vmatpush1.msra.mxu0 0.0
    %905 = vmatprep.subr.mxu0 0.0
    %906 = vmatpush1.msra.mxu0 0.0
    %907 = vmatprep.subr.mxu0 0.0
    %908 = vmatpush1.msra.mxu0 0.0
    %909 = vmatprep.mubr.f32.mxu0 0.0
    %910 = vmatmul.mubr.f32.gmra.mrb[0].mxu0 %v843
    %v911 = vpop.f32.mrb[0].mxu0
    %v912 = vadd.f32 0.0, %v911
    %v913 = vpop.f32.mrb[0].mxu0
    %v914 = vadd.f32 0.0, %v913
    %915 = vdwg.mxu0
    %v918 = vrot.slane %v912, 4
    %v919 = vrot.slane %v914, 4
    %v922 = vadd.f32 %v838, %v918
    %v923 = vadd.f32 %v839, %v919
    %v924 = vxor.u32 %v922, 2147483648
    %v925 = vmul.f32 %v924, 1.442695
    %v926 = vpow.pop %v925
    %v927 = vadd.f32 %v926, 1.0
    %v928 = vrcp.pop %v927
    %v929 = vmul.f32 1.0, %v928
    %v930 = vtanh.pop %v923
    %v931 = vxor.u32 %v923, 2147483648
    %v932 = vmul.f32 %v931, 1.442695
    %v933 = vpow.pop %v932
    %v934 = vadd.f32 %v933, 1.0
    %v935 = vrcp.pop %v934
    %v936 = vmul.f32 1.0, %v935
    %v938 = vrot.slane %v829, 6
    %v940 = vmul.f32 %v929, %v938
    %v941 = vmul.f32 %v929, %v930
    %943 = vrot.lane.b32.xlu0 %v941, 64
    %v944 = vpop.permute.xlu0 %943
    %v946 = vadd.f32 %v940, %v944
    %v947 = vtanh.pop %v946
    %v948 = vmul.f32 %v936, %v947
    %950 = vrot.lane.b32.xlu0 %v948, 64
    %v951 = vpop.permute.xlu0 %950
    %953 = vst.msk [vmem:[#allocation3 + $0x8] sm:$0x30] %vm490, %v951
    %954 = vst.msk [vmem:[#allocation3 - $0x2] sm:$0x30] %vm492, %v951
    %v955 = vld [vmem:[#allocation2 + $0x10] sm:$0xc0]
    %v956 = vld [vmem:[#allocation2 + $0x18] sm:$0xc0]
    %v957 = vrot.slane %v948, 4
    %958 = vrot.lane.b32.xlu0 %v957, 64
    %v959 = vpop.permute.xlu0 %958
    %v960 = vsel %vm152, %v959, 0
    %962 = vmatprep.subr.mxu0 %v135
    %963 = vmatpush1.msra.mxu0 %v134
    %964 = vmatprep.subr.mxu0 %v137
    %965 = vmatpush1.msra.mxu0 %v136
    %966 = vmatprep.subr.mxu0 %v139
    %967 = vmatpush1.msra.mxu0 %v138
    %968 = vmatprep.subr.mxu0 %v141
    %969 = vmatpush1.msra.mxu0 %v140
    %970 = vmatprep.subr.mxu0 %v143
    %971 = vmatpush1.msra.mxu0 %v142
    %972 = vmatprep.subr.mxu0 %v145
    %973 = vmatpush1.msra.mxu0 %v144
    %974 = vmatprep.subr.mxu0 %v147
    %975 = vmatpush1.msra.mxu0 %v146
    %976 = vmatprep.subr.mxu0 %v149
    %977 = vmatpush1.msra.mxu0 %v148
    %978 = vmatprep.subr.mxu0 0.0
    %979 = vmatpush1.msra.mxu0 0.0
    %980 = vmatprep.subr.mxu0 0.0
    %981 = vmatpush1.msra.mxu0 0.0
    %982 = vmatprep.subr.mxu0 0.0
    %983 = vmatpush1.msra.mxu0 0.0
    %984 = vmatprep.subr.mxu0 0.0
    %985 = vmatpush1.msra.mxu0 0.0
    %986 = vmatprep.subr.mxu0 0.0
    %987 = vmatpush1.msra.mxu0 0.0
    %988 = vmatprep.subr.mxu0 0.0
    %989 = vmatpush1.msra.mxu0 0.0
    %990 = vmatprep.subr.mxu0 0.0
    %991 = vmatpush1.msra.mxu0 0.0
    %992 = vmatprep.subr.mxu0 0.0
    %993 = vmatpush1.msra.mxu0 0.0
    %994 = vmatprep.subr.mxu0 0.0
    %995 = vmatpush1.msra.mxu0 0.0
    %996 = vmatprep.subr.mxu0 0.0
    %997 = vmatpush1.msra.mxu0 0.0
    %998 = vmatprep.subr.mxu0 0.0
    %999 = vmatpush1.msra.mxu0 0.0
    %1000 = vmatprep.subr.mxu0 0.0
    %1001 = vmatpush1.msra.mxu0 0.0
    %1002 = vmatprep.subr.mxu0 0.0
    %1003 = vmatpush1.msra.mxu0 0.0
    %1004 = vmatprep.subr.mxu0 0.0
    %1005 = vmatpush1.msra.mxu0 0.0
    %1006 = vmatprep.subr.mxu0 0.0
    %1007 = vmatpush1.msra.mxu0 0.0
    %1008 = vmatprep.subr.mxu0 0.0
    %1009 = vmatpush1.msra.mxu0 0.0
    %1010 = vmatprep.subr.mxu0 0.0
    %1011 = vmatpush1.msra.mxu0 0.0
    %1012 = vmatprep.subr.mxu0 0.0
    %1013 = vmatpush1.msra.mxu0 0.0
    %1014 = vmatprep.subr.mxu0 0.0
    %1015 = vmatpush1.msra.mxu0 0.0
    %1016 = vmatprep.subr.mxu0 0.0
    %1017 = vmatpush1.msra.mxu0 0.0
    %1018 = vmatprep.subr.mxu0 0.0
    %1019 = vmatpush1.msra.mxu0 0.0
    %1020 = vmatprep.subr.mxu0 0.0
    %1021 = vmatpush1.msra.mxu0 0.0
    %1022 = vmatprep.subr.mxu0 0.0
    %1023 = vmatpush1.msra.mxu0 0.0
    %1024 = vmatprep.subr.mxu0 0.0
    %1025 = vmatpush1.msra.mxu0 0.0
    %1026 = vmatprep.mubr.f32.mxu0 0.0
    %1027 = vmatmul.mubr.f32.gmra.mrb[0].mxu0 %v960
    %v1028 = vpop.f32.mrb[0].mxu0
    %v1029 = vadd.f32 0.0, %v1028
    %v1030 = vpop.f32.mrb[0].mxu0
    %v1031 = vadd.f32 0.0, %v1030
    %1032 = vdwg.mxu0
    %v1035 = vrot.slane %v1029, 2
    %v1036 = vrot.slane %v1031, 2
    %v1039 = vadd.f32 %v955, %v1035
    %v1040 = vadd.f32 %v956, %v1036
    %v1041 = vxor.u32 %v1039, 2147483648
    %v1042 = vmul.f32 %v1041, 1.442695
    %v1043 = vpow.pop %v1042
    %v1044 = vadd.f32 %v1043, 1.0
    %v1045 = vrcp.pop %v1044
    %v1046 = vmul.f32 1.0, %v1045
    %v1047 = vtanh.pop %v1040
    %v1048 = vxor.u32 %v1040, 2147483648
    %v1049 = vmul.f32 %v1048, 1.442695
    %v1050 = vpow.pop %v1049
    %v1051 = vadd.f32 %v1050, 1.0
    %v1052 = vrcp.pop %v1051
    %v1053 = vmul.f32 1.0, %v1052
    %v1055 = vrot.slane %v946, 6
    %v1057 = vmul.f32 %v1046, %v1055
    %v1058 = vmul.f32 %v1046, %v1047
    %1060 = vrot.lane.b32.xlu0 %v1058, 64
    %v1061 = vpop.permute.xlu0 %1060
    %v1063 = vadd.f32 %v1057, %v1061
    %v1064 = vtanh.pop %v1063
    %v1065 = vmul.f32 %v1053, %v1064
    %1067 = vrot.lane.b32.xlu0 %v1065, 64
    %v1068 = vpop.permute.xlu0 %1067
    %1070 = vst.msk [vmem:[#allocation3 + $0x8] sm:$0xc0] %vm609, %v1068
    %1071 = vst.msk [vmem:[#allocation3 - $0x6] sm:$0xc0] %vm611, %v1068
    %v1072 = vld [vmem:[#allocation3] sm:$0xff]
    %v1073 = vld [vmem:[#allocation3 + $0x8] sm:$0xff]
    %v1074 = vld [vmem:[%s4] sm:$0xff]
    %v1075 = vld [vmem:[%s4 + $0x8] sm:$0xff]
    %v1076 = vld [vmem:[%s4 + $0x10] sm:$0xff]
    %v1077 = vld [vmem:[%s4 + $0x18] sm:$0xff]
    %v1078 = vld [vmem:[%s4 + $0x20] sm:$0xff]
    %v1079 = vld [vmem:[%s4 + $0x28] sm:$0xff]
    %v1080 = vld [vmem:[%s4 + $0x30] sm:$0xff]
    %v1081 = vld [vmem:[%s4 + $0x38] sm:$0xff]
    %v1082 = vld [vmem:[%s5] sm:$0x1]
    %v1084 = vlaneseq
    %v1085 = vshrl.u32 %v1084, 7
    %v1086 = vsub.s32 0, %v1085
    %v1087 = vrot.slane %v1082, %v1086
    %v1090 = vsel %vm152, %v1072, 0
    %v1093 = vsel %vm152, %v1073, 0
    %1095 = vmatprep.subr.mxu0 0.0
    %1096 = vmatpush1.msra.mxu0 %v1074
    %1097 = vmatprep.subr.mxu0 0.0
    %1098 = vmatpush1.msra.mxu0 %v1075
    %1099 = vmatprep.subr.mxu0 0.0
    %1100 = vmatpush1.msra.mxu0 %v1076
    %1101 = vmatprep.subr.mxu0 0.0
    %1102 = vmatpush1.msra.mxu0 %v1077
    %1103 = vmatprep.subr.mxu0 0.0
    %1104 = vmatpush1.msra.mxu0 %v1078
    %1105 = vmatprep.subr.mxu0 0.0
    %1106 = vmatpush1.msra.mxu0 %v1079
    %1107 = vmatprep.subr.mxu0 0.0
    %1108 = vmatpush1.msra.mxu0 %v1080
    %1109 = vmatprep.subr.mxu0 0.0
    %1110 = vmatpush1.msra.mxu0 %v1081
    %1111 = vmatprep.subr.mxu0 0.0
    %1112 = vmatpush1.msra.mxu0 0.0
    %1113 = vmatprep.subr.mxu0 0.0
    %1114 = vmatpush1.msra.mxu0 0.0
    %1115 = vmatprep.subr.mxu0 0.0
    %1116 = vmatpush1.msra.mxu0 0.0
    %1117 = vmatprep.subr.mxu0 0.0
    %1118 = vmatpush1.msra.mxu0 0.0
    %1119 = vmatprep.subr.mxu0 0.0
    %1120 = vmatpush1.msra.mxu0 0.0
    %1121 = vmatprep.subr.mxu0 0.0
    %1122 = vmatpush1.msra.mxu0 0.0
    %1123 = vmatprep.subr.mxu0 0.0
    %1124 = vmatpush1.msra.mxu0 0.0
    %1125 = vmatprep.subr.mxu0 0.0
    %1126 = vmatpush1.msra.mxu0 0.0
    %1127 = vmatprep.subr.mxu0 0.0
    %1128 = vmatpush1.msra.mxu0 0.0
    %1129 = vmatprep.subr.mxu0 0.0
    %1130 = vmatpush1.msra.mxu0 0.0
    %1131 = vmatprep.subr.mxu0 0.0
    %1132 = vmatpush1.msra.mxu0 0.0
    %1133 = vmatprep.subr.mxu0 0.0
    %1134 = vmatpush1.msra.mxu0 0.0
    %1135 = vmatprep.subr.mxu0 0.0
    %1136 = vmatpush1.msra.mxu0 0.0
    %1137 = vmatprep.subr.mxu0 0.0
    %1138 = vmatpush1.msra.mxu0 0.0
    %1139 = vmatprep.subr.mxu0 0.0
    %1140 = vmatpush1.msra.mxu0 0.0
    %1141 = vmatprep.subr.mxu0 0.0
    %1142 = vmatpush1.msra.mxu0 0.0
    %1143 = vmatprep.subr.mxu0 0.0
    %1144 = vmatpush1.msra.mxu0 0.0
    %1145 = vmatprep.subr.mxu0 0.0
    %1146 = vmatpush1.msra.mxu0 0.0
    %1147 = vmatprep.subr.mxu0 0.0
    %1148 = vmatpush1.msra.mxu0 0.0
    %1149 = vmatprep.subr.mxu0 0.0
    %1150 = vmatpush1.msra.mxu0 0.0
    %1151 = vmatprep.subr.mxu0 0.0
    %1152 = vmatpush1.msra.mxu0 0.0
    %1153 = vmatprep.subr.mxu0 0.0
    %1154 = vmatpush1.msra.mxu0 0.0
    %1155 = vmatprep.subr.mxu0 0.0
    %1156 = vmatpush1.msra.mxu0 0.0
    %1157 = vmatprep.subr.mxu0 0.0
    %1158 = vmatpush1.msra.mxu0 0.0
    %1159 = vmatprep.mubr.f32.mxu0 0.0
    %1160 = vmatmul.mubr.f32.gmra.mrb[0].mxu0 %v1090
    %v1161 = vpop.f32.mrb[0].mxu0
    %v1162 = vadd.f32 %v1087, %v1161
    %v1163 = vpop.f32.mrb[0].mxu0
    %1164 = vmatprep.mubr.f32.mxu0 0.0
    %1165 = vmatmul.mubr.f32.gmra.mrb[0].mxu0 %v1093
    %v1166 = vpop.f32.mrb[0].mxu0
    %v1167 = vadd.f32 %v1087, %v1166
    %v1168 = vpop.f32.mrb[0].mxu0
    %1169 = vdwg.mxu0
    %vm1170 = vcmask 64512
    %1171 = vst.msk [vmem:[#allocation4] sm:$0xff] %vm1170, %v1162
    %1172 = vst.msk [vmem:[#allocation4 + $0x8] sm:$0xff] %vm1170, %v1167
    // Predicated region
    $region26: #{bidirectional_lstm.1} parent=1 // pred_check
      _
    $region27: #{bidirectional_lstm.1} parent=1 // pred_check_branch
      %1174 = sbr.rel (0) target = $region29
    $region28: #{bidirectional_lstm.1} parent=1 // pred_region
      %s1176 = ssub.s32 256, 256
      %1177 = vsyncadd [#allocation5], %s1176
      %s1178 = sshll.u32 [#allocation4], 4
      %s1179 = int_to_ptr.vmem [resolvable:$true] %s1178
      %1184 = dma.vmem_to_hbm [thread:$0]  %s1179, 256, %s6, [#allocation5], 128, 128, 8
    $region29: #{bidirectional_lstm.1} parent=1 // pred_fallthru
      _
    // Predicated region
    $region30: #{bidirectional_lstm.1} parent=1 // pred_check
      _
    $region31: #{bidirectional_lstm.1} parent=1 // pred_check_branch
      %1186 = sbr.rel (0) target = $region33
    $region32: #{bidirectional_lstm.1} parent=1 // pred_region
      %1187 = dma.done [#allocation5], 256
    $region33: #{bidirectional_lstm.1} parent=1 // pred_fallthru
      _
    %1188 = vsyncpa [#allocation5], 1

</llo_original>
